<compile_context>
chip_gen: v6e
topology: v6e:2x2x1
jax: 0.10.0
libtpu: 0.0.40
codegen_flags: <defaults>
</compile_context>

<pallas_src>
import math

import jax
import jax.numpy as jnp
from jax import lax
from jax.experimental import pallas as pl
from jax.experimental.pallas import tpu as pltpu

# ---- problem sizes (small, consistent with the module) ----
EMBED_DIM = 32     # embed_dim
HIDDEN_DIM = 64    # hidden_dim (2x embed)
NUM_HEADS = 4
HEAD_DIM = EMBED_DIM // NUM_HEADS
SEQ = 8            # sequence length
BATCH = 2
LN_EPS = 1e-5      # torch.nn.LayerNorm default eps
# dropout = 0.0 -> identity (eval semantics); nothing to implement.


def _layernorm(v, g, b):
    mu = jnp.mean(v, axis=-1, keepdims=True)
    var = jnp.mean(jnp.square(v - mu), axis=-1, keepdims=True)
    return (v - mu) * lax.rsqrt(var + LN_EPS) * g + b


def _gelu_exact(v):
    # torch nn.GELU() default = exact erf formulation
    return 0.5 * v * (1.0 + lax.erf(v * (1.0 / math.sqrt(2.0))))


def _mm(a, b):
    # a @ b with f32 accumulation on the MXU
    return jnp.dot(a, b, preferred_element_type=jnp.float32)


def attention_block_kernel(
    x_ref,                                   # (N, E), N = S*B, row = s*B + b
    ln1_g_ref, ln1_b_ref,                    # (1, E)
    wqkv_t_ref, bqkv_ref,                    # (E, 3E), (1, 3E)  Q-part pre-scaled
    wo_t_ref, bo_ref,                        # (E, E), (1, E)
    ln2_g_ref, ln2_b_ref,                    # (1, E)
    w1_t_ref, b1_ref,                        # (E, H), (1, H)
    w2_t_ref, b2_ref,                        # (H, E), (1, E)
    o_ref,                                   # (N, E)
):
    N, E = x_ref.shape
    x = x_ref[...]                                            # (N, E)

    # ---- x_norm = LayerNorm1(x) ----
    h = _layernorm(x, ln1_g_ref[...], ln1_b_ref[...])

    # ---- multi-head self-attention (torch in_proj then out_proj) ----
    qkv = _mm(h, wqkv_t_ref[...]) + bqkv_ref[...]             # (N, 3E)
    q = qkv[:, 0 * E:1 * E]   # already scaled by 1/sqrt(HEAD_DIM) via weights
    k = qkv[:, 1 * E:2 * E]
    v = qkv[:, 2 * E:3 * E]

    # Cross-batch mask: row n belongs to batch n % B; only same-batch
    # attention is allowed.  Built once, shared by all heads.
    ri = lax.broadcasted_iota(jnp.int32, (N, N), 0)
    ci = lax.broadcasted_iota(jnp.int32, (N, N), 1)
    same_batch = (ri % BATCH) == (ci % BATCH)
    neg_big = jnp.float32(-1e30)

    head_outs = []
    for hh in range(NUM_HEADS):               # static loop over heads
        lo = hh * HEAD_DIM
        qh = q[:, lo:lo + HEAD_DIM]                           # (N, hd)
        kh = k[:, lo:lo + HEAD_DIM]
        vh = v[:, lo:lo + HEAD_DIM]
        # scores = qh @ kh^T  (contract last dims, no explicit transpose)
        s = lax.dot_general(qh, kh, (((1,), (1,)), ((), ())),
                            preferred_element_type=jnp.float32)   # (N, N)
        s = jnp.where(same_batch, s, neg_big)
        s = s - jnp.max(s, axis=-1, keepdims=True)
        p = jnp.exp(s)                    # masked entries underflow to exactly 0
        denom = jnp.sum(p, axis=-1, keepdims=True)
        p = p * pl.reciprocal(denom, approx=False)
        head_outs.append(_mm(p, vh))                          # (N, hd)
    attn = jnp.concatenate(head_outs, axis=-1)                # (N, E)
    attn = _mm(attn, wo_t_ref[...]) + bo_ref[...]

    # ---- first residual ----
    x = x + attn

    # ---- MLP: Linear -> GELU -> Linear (dropout p=0 -> identity) ----
    h2 = _layernorm(x, ln2_g_ref[...], ln2_b_ref[...])
    h2 = _mm(h2, w1_t_ref[...]) + b1_ref[...]                 # (N, H)
    h2 = _gelu_exact(h2)
    h2 = _mm(h2, w2_t_ref[...]) + b2_ref[...]                 # (N, E)

    # ---- second residual ----
    o_ref[...] = x + h2


def attention_block(x_sbe, kp):
    """x_sbe: (S, B, E) float32 (PyTorch batch_first=False layout).

    kp: kernel-ready params (see prepare_params): weights pre-transposed and
    the Q projection pre-scaled by 1/sqrt(HEAD_DIM).
    """
    S, B, E = x_sbe.shape
    N = S * B
    # Row-major (S, B, E) -> (N, E) is a free bitcast (no transpose, no copy).
    x2d = x_sbe.reshape(N, E)

    weight_args = [
        kp["ln1_g"], kp["ln1_b"],
        kp["wqkv_t"], kp["bqkv"],
        kp["wo_t"], kp["bo"],
        kp["ln2_g"], kp["ln2_b"],
        kp["w1_t"], kp["b1"],
        kp["w2_t"], kp["b2"],
    ]

    def full_spec(shape):
        nd = len(shape)
        return pl.BlockSpec(shape, lambda *args, nd=nd: (0,) * nd)

    in_specs = [full_spec(x2d.shape)] + [full_spec(w.shape) for w in weight_args]

    out2d = pl.pallas_call(
        attention_block_kernel,
        out_shape=jax.ShapeDtypeStruct((N, E), x2d.dtype),
        grid=(1,),                       # single invocation: batch is folded
        in_specs=in_specs,
        out_specs=full_spec((N, E)),
        compiler_params=pltpu.CompilerParams(
            dimension_semantics=("arbitrary",)),
    )(x2d, *weight_args)

    # Free bitcast back to the module's (S, B, E) layout.
    return out2d.reshape(S, B, E)


def init_params(key):
    """Raw parameters, matching the PyTorch module's parameterization."""
    ks = jax.random.split(key, 8)
    f32 = jnp.float32
    scale = 0.02
    p = {
        "ln1_g": jnp.ones((1, EMBED_DIM), f32),
        "ln1_b": jnp.zeros((1, EMBED_DIM), f32),
        # in_proj_weight (3E, E) stored transposed -> (E, 3E)
        "wqkv_t": (scale * jax.random.normal(ks[0], (EMBED_DIM, 3 * EMBED_DIM))).astype(f32),
        "bqkv": (scale * jax.random.normal(ks[1], (1, 3 * EMBED_DIM))).astype(f32),
        # out_proj.weight (E, E) stored transposed -> (E, E)
        "wo_t": (scale * jax.random.normal(ks[2], (EMBED_DIM, EMBED_DIM))).astype(f32),
        "bo": (scale * jax.random.normal(ks[3], (1, EMBED_DIM))).astype(f32),
        "ln2_g": jnp.ones((1, EMBED_DIM), f32),
        "ln2_b": jnp.zeros((1, EMBED_DIM), f32),
        # linear[0].weight (H, E) stored transposed -> (E, H)
        "w1_t": (scale * jax.random.normal(ks[4], (EMBED_DIM, HIDDEN_DIM))).astype(f32),
        "b1": (scale * jax.random.normal(ks[5], (1, HIDDEN_DIM))).astype(f32),
        # linear[3].weight (E, H) stored transposed -> (H, E)
        "w2_t": (scale * jax.random.normal(ks[6], (HIDDEN_DIM, EMBED_DIM))).astype(f32),
        "b2": (scale * jax.random.normal(ks[7], (1, EMBED_DIM))).astype(f32),
    }
    return p


def prepare_params(p):
    """One-time (outside the hot path) transform: fold 1/sqrt(HEAD_DIM) into
    the Q columns of the QKV projection so the kernel skips the per-head scale."""
    sc = 1.0 / math.sqrt(HEAD_DIM)
    kp = dict(p)
    kp["wqkv_t"] = p["wqkv_t"].at[:, :EMBED_DIM].multiply(sc)
    kp["bqkv"] = p["bqkv"].at[:, :EMBED_DIM].multiply(sc)
    return kp


def reference(x_sbe, p):
    """Pure-JAX reference mirroring the PyTorch forward (eval / dropout=0).
    Uses the raw (unscaled) parameters."""
    def ln(v, g, b):
        mu = v.mean(-1, keepdims=True)
        var = ((v - mu) ** 2).mean(-1, keepdims=True)
        return (v - mu) / jnp.sqrt(var + LN_EPS) * g + b

    S, B, E = x_sbe.shape
    h = ln(x_sbe, p["ln1_g"][0], p["ln1_b"][0])
    qkv = h @ p["wqkv_t"] + p["bqkv"][0]
    q, k, v = qkv[..., :E], qkv[..., E:2 * E], qkv[..., 2 * E:]
    q = q.reshape(S, B, NUM_HEADS, HEAD_DIM) / math.sqrt(HEAD_DIM)
    k = k.reshape(S, B, NUM_HEADS, HEAD_DIM)
    v = v.reshape(S, B, NUM_HEADS, HEAD_DIM)
    scores = jnp.einsum("qbhd,kbhd->bhqk", q, k)
    w = jax.nn.softmax(scores, axis=-1)
    attn = jnp.einsum("bhqk,kbhd->qbhd", w, v).reshape(S, B, E)
    attn = attn @ p["wo_t"] + p["bo"][0]
    x = x_sbe + attn
    h2 = ln(x, p["ln2_g"][0], p["ln2_b"][0])
    h2 = h2 @ p["w1_t"] + p["b1"][0]
    h2 = jax.nn.gelu(h2, approximate=False)
    h2 = h2 @ p["w2_t"] + p["b2"][0]
    return x + h2


if __name__ == "__main__":
    key = jax.random.PRNGKey(0)
    k_x, k_p = jax.random.split(key)
    x = jax.random.normal(k_x, (SEQ, BATCH, EMBED_DIM), dtype=jnp.float32)
    params = init_params(k_p)
    kparams = prepare_params(params)   # one-time weight transform

    out = attention_block(x, kparams)
    out = jax.block_until_ready(out)

    ref = reference(x, params)
    assert out.shape == (SEQ, BATCH, EMBED_DIM)
    assert jnp.allclose(out, ref, rtol=1e-4, atol=1e-4), (
        f"max abs err {jnp.max(jnp.abs(out - ref))}"
    )
    print("KERNEL_OK")
</pallas_src>

<mosaic_0001>
module attributes {stable_mosaic.version = 11 : i64} {
  func.func @attention_block_kernel(%arg0: i32, %arg1: memref<16x32xf32, #tpu.memory_space<vmem>>, %arg2: memref<1x32xf32, #tpu.memory_space<vmem>>, %arg3: memref<1x32xf32, #tpu.memory_space<vmem>>, %arg4: memref<32x96xf32, #tpu.memory_space<vmem>>, %arg5: memref<1x96xf32, #tpu.memory_space<vmem>>, %arg6: memref<32x32xf32, #tpu.memory_space<vmem>>, %arg7: memref<1x32xf32, #tpu.memory_space<vmem>>, %arg8: memref<1x32xf32, #tpu.memory_space<vmem>>, %arg9: memref<1x32xf32, #tpu.memory_space<vmem>>, %arg10: memref<32x64xf32, #tpu.memory_space<vmem>>, %arg11: memref<1x64xf32, #tpu.memory_space<vmem>>, %arg12: memref<64x32xf32, #tpu.memory_space<vmem>>, %arg13: memref<1x32xf32, #tpu.memory_space<vmem>>, %arg14: memref<16x32xf32, #tpu.memory_space<vmem>>) attributes {dimension_semantics = [#tpu.dimension_semantics<arbitrary>], iteration_bounds = array<i64: 1>, scalar_prefetch = 0 : i64, scratch_operands = 0 : i64, tpu.core_type = #tpu.core_type<tc>, window_params = [{pipeline_mode = #tpu.pipeline_mode<synchronous>, transform_indices = @transform_0, window_bounds = array<i64: 16, 32>}, {pipeline_mode = #tpu.pipeline_mode<synchronous>, transform_indices = @transform_1, window_bounds = array<i64: 1, 32>}, {pipeline_mode = #tpu.pipeline_mode<synchronous>, transform_indices = @transform_2, window_bounds = array<i64: 1, 32>}, {pipeline_mode = #tpu.pipeline_mode<synchronous>, transform_indices = @transform_3, window_bounds = array<i64: 32, 96>}, {pipeline_mode = #tpu.pipeline_mode<synchronous>, transform_indices = @transform_4, window_bounds = array<i64: 1, 96>}, {pipeline_mode = #tpu.pipeline_mode<synchronous>, transform_indices = @transform_5, window_bounds = array<i64: 32, 32>}, {pipeline_mode = #tpu.pipeline_mode<synchronous>, transform_indices = @transform_6, window_bounds = array<i64: 1, 32>}, {pipeline_mode = #tpu.pipeline_mode<synchronous>, transform_indices = @transform_7, window_bounds = array<i64: 1, 32>}, {pipeline_mode = #tpu.pipeline_mode<synchronous>, transform_indices = @transform_8, window_bounds = array<i64: 1, 32>}, {pipeline_mode = #tpu.pipeline_mode<synchronous>, transform_indices = @transform_9, window_bounds = array<i64: 32, 64>}, {pipeline_mode = #tpu.pipeline_mode<synchronous>, transform_indices = @transform_10, window_bounds = array<i64: 1, 64>}, {pipeline_mode = #tpu.pipeline_mode<synchronous>, transform_indices = @transform_11, window_bounds = array<i64: 64, 32>}, {pipeline_mode = #tpu.pipeline_mode<synchronous>, transform_indices = @transform_12, window_bounds = array<i64: 1, 32>}, {pipeline_mode = #tpu.pipeline_mode<synchronous>, transform_indices = @transform_13, window_bounds = array<i64: 16, 32>}]} {
    %c0 = arith.constant 0 : index
    %c0_0 = arith.constant 0 : index
    %0 = vector.load %arg1[%c0, %c0_0] : memref<16x32xf32, #tpu.memory_space<vmem>>, vector<16x32xf32>
    %c0_1 = arith.constant 0 : index
    %c0_2 = arith.constant 0 : index
    %1 = vector.load %arg2[%c0_1, %c0_2] : memref<1x32xf32, #tpu.memory_space<vmem>>, vector<1x32xf32>
    %c0_3 = arith.constant 0 : index
    %c0_4 = arith.constant 0 : index
    %2 = vector.load %arg3[%c0_3, %c0_4] : memref<1x32xf32, #tpu.memory_space<vmem>>, vector<1x32xf32>
    %cst = arith.constant dense<0.000000e+00> : vector<16xf32>
    %3 = vector.multi_reduction <add>, %0, %cst [1] : vector<16x32xf32> to vector<16xf32>
    %4 = vector.shape_cast %3 : vector<16xf32> to vector<16x1xf32>
    %cst_5 = arith.constant 3.200000e+01 : f32
    %5 = vector.broadcast %cst_5 : f32 to vector<16x1xf32>
    %6 = arith.divf %4, %5 : vector<16x1xf32>
    %7 = vector.broadcast %6 : vector<16x1xf32> to vector<16x32xf32>
    %8 = arith.subf %0, %7 : vector<16x32xf32>
    %9 = arith.mulf %8, %8 : vector<16x32xf32>
    %cst_6 = arith.constant dense<0.000000e+00> : vector<16xf32>
    %10 = vector.multi_reduction <add>, %9, %cst_6 [1] : vector<16x32xf32> to vector<16xf32>
    %11 = vector.shape_cast %10 : vector<16xf32> to vector<16x1xf32>
    %cst_7 = arith.constant 3.200000e+01 : f32
    %12 = vector.broadcast %cst_7 : f32 to vector<16x1xf32>
    %13 = arith.divf %11, %12 : vector<16x1xf32>
    %14 = vector.broadcast %6 : vector<16x1xf32> to vector<16x32xf32>
    %15 = arith.subf %0, %14 : vector<16x32xf32>
    %cst_8 = arith.constant 9.99999974E-6 : f32
    %16 = vector.broadcast %cst_8 : f32 to vector<16x1xf32>
    %17 = arith.addf %13, %16 : vector<16x1xf32>
    %18 = math.rsqrt %17 : vector<16x1xf32>
    %19 = vector.broadcast %18 : vector<16x1xf32> to vector<16x32xf32>
    %20 = arith.mulf %15, %19 : vector<16x32xf32>
    %21 = vector.broadcast %1 : vector<1x32xf32> to vector<16x32xf32>
    %22 = arith.mulf %20, %21 : vector<16x32xf32>
    %23 = vector.broadcast %2 : vector<1x32xf32> to vector<16x32xf32>
    %24 = arith.addf %22, %23 : vector<16x32xf32>
    %c0_9 = arith.constant 0 : index
    %c0_10 = arith.constant 0 : index
    %25 = vector.load %arg4[%c0_9, %c0_10] : memref<32x96xf32, #tpu.memory_space<vmem>>, vector<32x96xf32>
    %cst_11 = arith.constant dense<0.000000e+00> : vector<16x96xf32>
    %26 = tpu.matmul %24, %25, %cst_11 {dimension_numbers = #tpu.dot_dimension_numbers<[1], [0], [0], [1], [0, 0, 1, 1], [], []>} : vector<16x32xf32>, vector<32x96xf32>, vector<16x96xf32> -> vector<16x96xf32>
    %c0_12 = arith.constant 0 : index
    %c0_13 = arith.constant 0 : index
    %27 = vector.load %arg5[%c0_12, %c0_13] : memref<1x96xf32, #tpu.memory_space<vmem>>, vector<1x96xf32>
    %28 = vector.broadcast %27 : vector<1x96xf32> to vector<16x96xf32>
    %29 = arith.addf %26, %28 : vector<16x96xf32>
    %30 = vector.extract_strided_slice %29 {offsets = [0, 0], sizes = [16, 32], strides = [1, 1]} : vector<16x96xf32> to vector<16x32xf32>
    %31 = vector.extract_strided_slice %29 {offsets = [0, 32], sizes = [16, 32], strides = [1, 1]} : vector<16x96xf32> to vector<16x32xf32>
    %32 = vector.extract_strided_slice %29 {offsets = [0, 64], sizes = [16, 32], strides = [1, 1]} : vector<16x96xf32> to vector<16x32xf32>
    %33 = tpu.iota {dimensions = array<i32: 0>} : vector<16x16xi32>
    %34 = tpu.iota {dimensions = array<i32: 1>} : vector<16x16xi32>
    %c2_i32 = arith.constant 2 : i32
    %c0_i32 = arith.constant 0 : i32
    %35 = arith.cmpi eq, %c2_i32, %c0_i32 : i32
    %c1_i32 = arith.constant 1 : i32
    %36 = arith.select %35, %c1_i32, %c2_i32 : i32
    %37 = vector.broadcast %36 : i32 to vector<16x16xi32>
    %38 = arith.remsi %33, %37 : vector<16x16xi32>
    %c0_i32_14 = arith.constant 0 : i32
    %39 = vector.broadcast %c0_i32_14 : i32 to vector<16x16xi32>
    %40 = arith.cmpi ne, %38, %39 : vector<16x16xi32>
    %c0_i32_15 = arith.constant 0 : i32
    %41 = vector.broadcast %c0_i32_15 : i32 to vector<16x16xi32>
    %42 = arith.cmpi slt, %38, %41 : vector<16x16xi32>
    %c0_i32_16 = arith.constant 0 : i32
    %43 = arith.cmpi slt, %36, %c0_i32_16 : i32
    %44 = vector.broadcast %43 : i1 to vector<16x16xi1>
    %45 = vector.broadcast %44 : vector<16x16xi1> to vector<16x16xi1>
    %46 = arith.xori %42, %45 : vector<16x16xi1>
    %47 = arith.andi %46, %40 : vector<16x16xi1>
    %48 = vector.broadcast %36 : i32 to vector<16x16xi32>
    %49 = arith.addi %38, %48 : vector<16x16xi32>
    %50 = arith.select %47, %49, %38 : vector<16x16xi1>, vector<16x16xi32>
    %c2_i32_17 = arith.constant 2 : i32
    %c0_i32_18 = arith.constant 0 : i32
    %51 = arith.cmpi eq, %c2_i32_17, %c0_i32_18 : i32
    %c1_i32_19 = arith.constant 1 : i32
    %52 = arith.select %51, %c1_i32_19, %c2_i32_17 : i32
    %53 = vector.broadcast %52 : i32 to vector<16x16xi32>
    %54 = arith.remsi %34, %53 : vector<16x16xi32>
    %c0_i32_20 = arith.constant 0 : i32
    %55 = vector.broadcast %c0_i32_20 : i32 to vector<16x16xi32>
    %56 = arith.cmpi ne, %54, %55 : vector<16x16xi32>
    %c0_i32_21 = arith.constant 0 : i32
    %57 = vector.broadcast %c0_i32_21 : i32 to vector<16x16xi32>
    %58 = arith.cmpi slt, %54, %57 : vector<16x16xi32>
    %c0_i32_22 = arith.constant 0 : i32
    %59 = arith.cmpi slt, %52, %c0_i32_22 : i32
    %60 = vector.broadcast %59 : i1 to vector<16x16xi1>
    %61 = vector.broadcast %60 : vector<16x16xi1> to vector<16x16xi1>
    %62 = arith.xori %58, %61 : vector<16x16xi1>
    %63 = arith.andi %62, %56 : vector<16x16xi1>
    %64 = vector.broadcast %52 : i32 to vector<16x16xi32>
    %65 = arith.addi %54, %64 : vector<16x16xi32>
    %66 = arith.select %63, %65, %54 : vector<16x16xi1>, vector<16x16xi32>
    %67 = arith.cmpi eq, %50, %66 : vector<16x16xi32>
    %68 = vector.extract_strided_slice %30 {offsets = [0, 0], sizes = [16, 8], strides = [1, 1]} : vector<16x32xf32> to vector<16x8xf32>
    %69 = vector.extract_strided_slice %31 {offsets = [0, 0], sizes = [16, 8], strides = [1, 1]} : vector<16x32xf32> to vector<16x8xf32>
    %70 = vector.extract_strided_slice %32 {offsets = [0, 0], sizes = [16, 8], strides = [1, 1]} : vector<16x32xf32> to vector<16x8xf32>
    %cst_23 = arith.constant dense<0.000000e+00> : vector<16x16xf32>
    %71 = tpu.matmul %68, %69, %cst_23 {dimension_numbers = #tpu.dot_dimension_numbers<[1], [1], [0], [0], [0, 0, 1, 0], [], []>} : vector<16x8xf32>, vector<16x8xf32>, vector<16x16xf32> -> vector<16x16xf32>
    %cst_24 = arith.constant -1.000000e+30 : f32
    %72 = vector.broadcast %cst_24 : f32 to vector<16x16xf32>
    %73 = arith.select %67, %71, %72 : vector<16x16xi1>, vector<16x16xf32>
    %cst_25 = arith.constant dense<0xFF800000> : vector<16xf32>
    %74 = vector.multi_reduction <maximumf>, %73, %cst_25 [1] : vector<16x16xf32> to vector<16xf32>
    %75 = vector.shape_cast %74 : vector<16xf32> to vector<16x1xf32>
    %76 = vector.broadcast %75 : vector<16x1xf32> to vector<16x16xf32>
    %77 = arith.subf %73, %76 : vector<16x16xf32>
    %78 = math.exp %77 : vector<16x16xf32>
    %cst_26 = arith.constant dense<0.000000e+00> : vector<16xf32>
    %79 = vector.multi_reduction <add>, %78, %cst_26 [1] : vector<16x16xf32> to vector<16xf32>
    %80 = vector.shape_cast %79 : vector<16xf32> to vector<16x1xf32>
    %81 = tpu.reciprocal %80 : vector<16x1xf32> -> vector<16x1xf32>
    %82 = vector.broadcast %81 : vector<16x1xf32> to vector<16x16xf32>
    %83 = arith.mulf %78, %82 : vector<16x16xf32>
    %cst_27 = arith.constant dense<0.000000e+00> : vector<16x8xf32>
    %84 = tpu.matmul %83, %70, %cst_27 {dimension_numbers = #tpu.dot_dimension_numbers<[1], [0], [0], [1], [0, 0, 1, 1], [], []>} : vector<16x16xf32>, vector<16x8xf32>, vector<16x8xf32> -> vector<16x8xf32>
    %85 = vector.extract_strided_slice %30 {offsets = [0, 8], sizes = [16, 8], strides = [1, 1]} : vector<16x32xf32> to vector<16x8xf32>
    %86 = vector.extract_strided_slice %31 {offsets = [0, 8], sizes = [16, 8], strides = [1, 1]} : vector<16x32xf32> to vector<16x8xf32>
    %87 = vector.extract_strided_slice %32 {offsets = [0, 8], sizes = [16, 8], strides = [1, 1]} : vector<16x32xf32> to vector<16x8xf32>
    %cst_28 = arith.constant dense<0.000000e+00> : vector<16x16xf32>
    %88 = tpu.matmul %85, %86, %cst_28 {dimension_numbers = #tpu.dot_dimension_numbers<[1], [1], [0], [0], [0, 0, 1, 0], [], []>} : vector<16x8xf32>, vector<16x8xf32>, vector<16x16xf32> -> vector<16x16xf32>
    %cst_29 = arith.constant -1.000000e+30 : f32
    %89 = vector.broadcast %cst_29 : f32 to vector<16x16xf32>
    %90 = arith.select %67, %88, %89 : vector<16x16xi1>, vector<16x16xf32>
    %cst_30 = arith.constant dense<0xFF800000> : vector<16xf32>
    %91 = vector.multi_reduction <maximumf>, %90, %cst_30 [1] : vector<16x16xf32> to vector<16xf32>
    %92 = vector.shape_cast %91 : vector<16xf32> to vector<16x1xf32>
    %93 = vector.broadcast %92 : vector<16x1xf32> to vector<16x16xf32>
    %94 = arith.subf %90, %93 : vector<16x16xf32>
    %95 = math.exp %94 : vector<16x16xf32>
    %cst_31 = arith.constant dense<0.000000e+00> : vector<16xf32>
    %96 = vector.multi_reduction <add>, %95, %cst_31 [1] : vector<16x16xf32> to vector<16xf32>
    %97 = vector.shape_cast %96 : vector<16xf32> to vector<16x1xf32>
    %98 = tpu.reciprocal %97 : vector<16x1xf32> -> vector<16x1xf32>
    %99 = vector.broadcast %98 : vector<16x1xf32> to vector<16x16xf32>
    %100 = arith.mulf %95, %99 : vector<16x16xf32>
    %cst_32 = arith.constant dense<0.000000e+00> : vector<16x8xf32>
    %101 = tpu.matmul %100, %87, %cst_32 {dimension_numbers = #tpu.dot_dimension_numbers<[1], [0], [0], [1], [0, 0, 1, 1], [], []>} : vector<16x16xf32>, vector<16x8xf32>, vector<16x8xf32> -> vector<16x8xf32>
    %102 = vector.extract_strided_slice %30 {offsets = [0, 16], sizes = [16, 8], strides = [1, 1]} : vector<16x32xf32> to vector<16x8xf32>
    %103 = vector.extract_strided_slice %31 {offsets = [0, 16], sizes = [16, 8], strides = [1, 1]} : vector<16x32xf32> to vector<16x8xf32>
    %104 = vector.extract_strided_slice %32 {offsets = [0, 16], sizes = [16, 8], strides = [1, 1]} : vector<16x32xf32> to vector<16x8xf32>
    %cst_33 = arith.constant dense<0.000000e+00> : vector<16x16xf32>
    %105 = tpu.matmul %102, %103, %cst_33 {dimension_numbers = #tpu.dot_dimension_numbers<[1], [1], [0], [0], [0, 0, 1, 0], [], []>} : vector<16x8xf32>, vector<16x8xf32>, vector<16x16xf32> -> vector<16x16xf32>
    %cst_34 = arith.constant -1.000000e+30 : f32
    %106 = vector.broadcast %cst_34 : f32 to vector<16x16xf32>
    %107 = arith.select %67, %105, %106 : vector<16x16xi1>, vector<16x16xf32>
    %cst_35 = arith.constant dense<0xFF800000> : vector<16xf32>
    %108 = vector.multi_reduction <maximumf>, %107, %cst_35 [1] : vector<16x16xf32> to vector<16xf32>
    %109 = vector.shape_cast %108 : vector<16xf32> to vector<16x1xf32>
    %110 = vector.broadcast %109 : vector<16x1xf32> to vector<16x16xf32>
    %111 = arith.subf %107, %110 : vector<16x16xf32>
    %112 = math.exp %111 : vector<16x16xf32>
    %cst_36 = arith.constant dense<0.000000e+00> : vector<16xf32>
    %113 = vector.multi_reduction <add>, %112, %cst_36 [1] : vector<16x16xf32> to vector<16xf32>
    %114 = vector.shape_cast %113 : vector<16xf32> to vector<16x1xf32>
    %115 = tpu.reciprocal %114 : vector<16x1xf32> -> vector<16x1xf32>
    %116 = vector.broadcast %115 : vector<16x1xf32> to vector<16x16xf32>
    %117 = arith.mulf %112, %116 : vector<16x16xf32>
    %cst_37 = arith.constant dense<0.000000e+00> : vector<16x8xf32>
    %118 = tpu.matmul %117, %104, %cst_37 {dimension_numbers = #tpu.dot_dimension_numbers<[1], [0], [0], [1], [0, 0, 1, 1], [], []>} : vector<16x16xf32>, vector<16x8xf32>, vector<16x8xf32> -> vector<16x8xf32>
    %119 = vector.extract_strided_slice %30 {offsets = [0, 24], sizes = [16, 8], strides = [1, 1]} : vector<16x32xf32> to vector<16x8xf32>
    %120 = vector.extract_strided_slice %31 {offsets = [0, 24], sizes = [16, 8], strides = [1, 1]} : vector<16x32xf32> to vector<16x8xf32>
    %121 = vector.extract_strided_slice %32 {offsets = [0, 24], sizes = [16, 8], strides = [1, 1]} : vector<16x32xf32> to vector<16x8xf32>
    %cst_38 = arith.constant dense<0.000000e+00> : vector<16x16xf32>
    %122 = tpu.matmul %119, %120, %cst_38 {dimension_numbers = #tpu.dot_dimension_numbers<[1], [1], [0], [0], [0, 0, 1, 0], [], []>} : vector<16x8xf32>, vector<16x8xf32>, vector<16x16xf32> -> vector<16x16xf32>
    %cst_39 = arith.constant -1.000000e+30 : f32
    %123 = vector.broadcast %cst_39 : f32 to vector<16x16xf32>
    %124 = arith.select %67, %122, %123 : vector<16x16xi1>, vector<16x16xf32>
    %cst_40 = arith.constant dense<0xFF800000> : vector<16xf32>
    %125 = vector.multi_reduction <maximumf>, %124, %cst_40 [1] : vector<16x16xf32> to vector<16xf32>
    %126 = vector.shape_cast %125 : vector<16xf32> to vector<16x1xf32>
    %127 = vector.broadcast %126 : vector<16x1xf32> to vector<16x16xf32>
    %128 = arith.subf %124, %127 : vector<16x16xf32>
    %129 = math.exp %128 : vector<16x16xf32>
    %cst_41 = arith.constant dense<0.000000e+00> : vector<16xf32>
    %130 = vector.multi_reduction <add>, %129, %cst_41 [1] : vector<16x16xf32> to vector<16xf32>
    %131 = vector.shape_cast %130 : vector<16xf32> to vector<16x1xf32>
    %132 = tpu.reciprocal %131 : vector<16x1xf32> -> vector<16x1xf32>
    %133 = vector.broadcast %132 : vector<16x1xf32> to vector<16x16xf32>
    %134 = arith.mulf %129, %133 : vector<16x16xf32>
    %cst_42 = arith.constant dense<0.000000e+00> : vector<16x8xf32>
    %135 = tpu.matmul %134, %121, %cst_42 {dimension_numbers = #tpu.dot_dimension_numbers<[1], [0], [0], [1], [0, 0, 1, 1], [], []>} : vector<16x16xf32>, vector<16x8xf32>, vector<16x8xf32> -> vector<16x8xf32>
    %136 = tpu.concatenate %84, %101, %118, %135 in 1 : vector<16x8xf32>, vector<16x8xf32>, vector<16x8xf32>, vector<16x8xf32> -> vector<16x32xf32>
    %c0_43 = arith.constant 0 : index
    %c0_44 = arith.constant 0 : index
    %137 = vector.load %arg6[%c0_43, %c0_44] : memref<32x32xf32, #tpu.memory_space<vmem>>, vector<32x32xf32>
    %cst_45 = arith.constant dense<0.000000e+00> : vector<16x32xf32>
    %138 = tpu.matmul %136, %137, %cst_45 {dimension_numbers = #tpu.dot_dimension_numbers<[1], [0], [0], [1], [0, 0, 1, 1], [], []>} : vector<16x32xf32>, vector<32x32xf32>, vector<16x32xf32> -> vector<16x32xf32>
    %c0_46 = arith.constant 0 : index
    %c0_47 = arith.constant 0 : index
    %139 = vector.load %arg7[%c0_46, %c0_47] : memref<1x32xf32, #tpu.memory_space<vmem>>, vector<1x32xf32>
    %140 = vector.broadcast %139 : vector<1x32xf32> to vector<16x32xf32>
    %141 = arith.addf %138, %140 : vector<16x32xf32>
    %142 = arith.addf %0, %141 : vector<16x32xf32>
    %c0_48 = arith.constant 0 : index
    %c0_49 = arith.constant 0 : index
    %143 = vector.load %arg8[%c0_48, %c0_49] : memref<1x32xf32, #tpu.memory_space<vmem>>, vector<1x32xf32>
    %c0_50 = arith.constant 0 : index
    %c0_51 = arith.constant 0 : index
    %144 = vector.load %arg9[%c0_50, %c0_51] : memref<1x32xf32, #tpu.memory_space<vmem>>, vector<1x32xf32>
    %cst_52 = arith.constant dense<0.000000e+00> : vector<16xf32>
    %145 = vector.multi_reduction <add>, %142, %cst_52 [1] : vector<16x32xf32> to vector<16xf32>
    %146 = vector.shape_cast %145 : vector<16xf32> to vector<16x1xf32>
    %cst_53 = arith.constant 3.200000e+01 : f32
    %147 = vector.broadcast %cst_53 : f32 to vector<16x1xf32>
    %148 = arith.divf %146, %147 : vector<16x1xf32>
    %149 = vector.broadcast %148 : vector<16x1xf32> to vector<16x32xf32>
    %150 = arith.subf %142, %149 : vector<16x32xf32>
    %151 = arith.mulf %150, %150 : vector<16x32xf32>
    %cst_54 = arith.constant dense<0.000000e+00> : vector<16xf32>
    %152 = vector.multi_reduction <add>, %151, %cst_54 [1] : vector<16x32xf32> to vector<16xf32>
    %153 = vector.shape_cast %152 : vector<16xf32> to vector<16x1xf32>
    %cst_55 = arith.constant 3.200000e+01 : f32
    %154 = vector.broadcast %cst_55 : f32 to vector<16x1xf32>
    %155 = arith.divf %153, %154 : vector<16x1xf32>
    %156 = vector.broadcast %148 : vector<16x1xf32> to vector<16x32xf32>
    %157 = arith.subf %142, %156 : vector<16x32xf32>
    %cst_56 = arith.constant 9.99999974E-6 : f32
    %158 = vector.broadcast %cst_56 : f32 to vector<16x1xf32>
    %159 = arith.addf %155, %158 : vector<16x1xf32>
    %160 = math.rsqrt %159 : vector<16x1xf32>
    %161 = vector.broadcast %160 : vector<16x1xf32> to vector<16x32xf32>
    %162 = arith.mulf %157, %161 : vector<16x32xf32>
    %163 = vector.broadcast %143 : vector<1x32xf32> to vector<16x32xf32>
    %164 = arith.mulf %162, %163 : vector<16x32xf32>
    %165 = vector.broadcast %144 : vector<1x32xf32> to vector<16x32xf32>
    %166 = arith.addf %164, %165 : vector<16x32xf32>
    %c0_57 = arith.constant 0 : index
    %c0_58 = arith.constant 0 : index
    %167 = vector.load %arg10[%c0_57, %c0_58] : memref<32x64xf32, #tpu.memory_space<vmem>>, vector<32x64xf32>
    %cst_59 = arith.constant dense<0.000000e+00> : vector<16x64xf32>
    %168 = tpu.matmul %166, %167, %cst_59 {dimension_numbers = #tpu.dot_dimension_numbers<[1], [0], [0], [1], [0, 0, 1, 1], [], []>} : vector<16x32xf32>, vector<32x64xf32>, vector<16x64xf32> -> vector<16x64xf32>
    %c0_60 = arith.constant 0 : index
    %c0_61 = arith.constant 0 : index
    %169 = vector.load %arg11[%c0_60, %c0_61] : memref<1x64xf32, #tpu.memory_space<vmem>>, vector<1x64xf32>
    %170 = vector.broadcast %169 : vector<1x64xf32> to vector<16x64xf32>
    %171 = arith.addf %168, %170 : vector<16x64xf32>
    %cst_62 = arith.constant 5.000000e-01 : f32
    %172 = vector.broadcast %cst_62 : f32 to vector<16x64xf32>
    %173 = arith.mulf %172, %171 : vector<16x64xf32>
    %cst_63 = arith.constant 0.707106769 : f32
    %174 = vector.broadcast %cst_63 : f32 to vector<16x64xf32>
    %175 = arith.mulf %171, %174 : vector<16x64xf32>
    %176 = math.erf %175 : vector<16x64xf32>
    %cst_64 = arith.constant 1.000000e+00 : f32
    %177 = vector.broadcast %cst_64 : f32 to vector<16x64xf32>
    %178 = arith.addf %177, %176 : vector<16x64xf32>
    %179 = arith.mulf %173, %178 : vector<16x64xf32>
    %c0_65 = arith.constant 0 : index
    %c0_66 = arith.constant 0 : index
    %180 = vector.load %arg12[%c0_65, %c0_66] : memref<64x32xf32, #tpu.memory_space<vmem>>, vector<64x32xf32>
    %cst_67 = arith.constant dense<0.000000e+00> : vector<16x32xf32>
    %181 = tpu.matmul %179, %180, %cst_67 {dimension_numbers = #tpu.dot_dimension_numbers<[1], [0], [0], [1], [0, 0, 1, 1], [], []>} : vector<16x64xf32>, vector<64x32xf32>, vector<16x32xf32> -> vector<16x32xf32>
    %c0_68 = arith.constant 0 : index
    %c0_69 = arith.constant 0 : index
    %182 = vector.load %arg13[%c0_68, %c0_69] : memref<1x32xf32, #tpu.memory_space<vmem>>, vector<1x32xf32>
    %183 = vector.broadcast %182 : vector<1x32xf32> to vector<16x32xf32>
    %184 = arith.addf %181, %183 : vector<16x32xf32>
    %185 = arith.addf %142, %184 : vector<16x32xf32>
    %c0_70 = arith.constant 0 : index
    %c0_71 = arith.constant 0 : index
    %186 = vector.load %arg14[%c0_70, %c0_71] : memref<16x32xf32, #tpu.memory_space<vmem>>, vector<16x32xf32>
    tpu.vector_store %arg14[%c0_70, %c0_71], %185 {strides = array<i32>} : memref<16x32xf32, #tpu.memory_space<vmem>>, vector<16x32xf32>,
    return
  }
  func.func @transform_0(%arg0: i32) -> (i32, i32) {
    %c0_i32 = arith.constant 0 : i32
    %c0_i32_0 = arith.constant 0 : i32
    %c0_i32_1 = arith.constant 0 : i32
    return %c0_i32, %c0_i32_0 : i32, i32
  }
  func.func @transform_1(%arg0: i32) -> (i32, i32) {
    %c0_i32 = arith.constant 0 : i32
    %c0_i32_0 = arith.constant 0 : i32
    %c0_i32_1 = arith.constant 0 : i32
    return %c0_i32, %c0_i32_0 : i32, i32
  }
  func.func @transform_2(%arg0: i32) -> (i32, i32) {
    %c0_i32 = arith.constant 0 : i32
    %c0_i32_0 = arith.constant 0 : i32
    %c0_i32_1 = arith.constant 0 : i32
    return %c0_i32, %c0_i32_0 : i32, i32
  }
  func.func @transform_3(%arg0: i32) -> (i32, i32) {
    %c0_i32 = arith.constant 0 : i32
    %c0_i32_0 = arith.constant 0 : i32
    %c0_i32_1 = arith.constant 0 : i32
    return %c0_i32, %c0_i32_0 : i32, i32
  }
  func.func @transform_4(%arg0: i32) -> (i32, i32) {
    %c0_i32 = arith.constant 0 : i32
    %c0_i32_0 = arith.constant 0 : i32
    %c0_i32_1 = arith.constant 0 : i32
    return %c0_i32, %c0_i32_0 : i32, i32
  }
  func.func @transform_5(%arg0: i32) -> (i32, i32) {
    %c0_i32 = arith.constant 0 : i32
    %c0_i32_0 = arith.constant 0 : i32
    %c0_i32_1 = arith.constant 0 : i32
    return %c0_i32, %c0_i32_0 : i32, i32
  }
  func.func @transform_6(%arg0: i32) -> (i32, i32) {
    %c0_i32 = arith.constant 0 : i32
    %c0_i32_0 = arith.constant 0 : i32
    %c0_i32_1 = arith.constant 0 : i32
    return %c0_i32, %c0_i32_0 : i32, i32
  }
  func.func @transform_7(%arg0: i32) -> (i32, i32) {
    %c0_i32 = arith.constant 0 : i32
    %c0_i32_0 = arith.constant 0 : i32
    %c0_i32_1 = arith.constant 0 : i32
    return %c0_i32, %c0_i32_0 : i32, i32
  }
  func.func @transform_8(%arg0: i32) -> (i32, i32) {
    %c0_i32 = arith.constant 0 : i32
    %c0_i32_0 = arith.constant 0 : i32
    %c0_i32_1 = arith.constant 0 : i32
    return %c0_i32, %c0_i32_0 : i32, i32
  }
  func.func @transform_9(%arg0: i32) -> (i32, i32) {
    %c0_i32 = arith.constant 0 : i32
    %c0_i32_0 = arith.constant 0 : i32
    %c0_i32_1 = arith.constant 0 : i32
    return %c0_i32, %c0_i32_0 : i32, i32
  }
  func.func @transform_10(%arg0: i32) -> (i32, i32) {
    %c0_i32 = arith.constant 0 : i32
    %c0_i32_0 = arith.constant 0 : i32
    %c0_i32_1 = arith.constant 0 : i32
    return %c0_i32, %c0_i32_0 : i32, i32
  }
  func.func @transform_11(%arg0: i32) -> (i32, i32) {
    %c0_i32 = arith.constant 0 : i32
    %c0_i32_0 = arith.constant 0 : i32
    %c0_i32_1 = arith.constant 0 : i32
    return %c0_i32, %c0_i32_0 : i32, i32
  }
  func.func @transform_12(%arg0: i32) -> (i32, i32) {
    %c0_i32 = arith.constant 0 : i32
    %c0_i32_0 = arith.constant 0 : i32
    %c0_i32_1 = arith.constant 0 : i32
    return %c0_i32, %c0_i32_0 : i32, i32
  }
  func.func @transform_13(%arg0: i32) -> (i32, i32) {
    %c0_i32 = arith.constant 0 : i32
    %c0_i32_0 = arith.constant 0 : i32
    %c0_i32_1 = arith.constant 0 : i32
    return %c0_i32, %c0_i32_0 : i32, i32
  }
}

</mosaic_0001>

<llo_original>
// kernel: tpu_custom_call.1
$region0: #{tpu_custom_call.1}
  #allocation0 [shape = 'u32[]', space=smem, size = 0x4, offset = 0x4, fixed_abs, tag = 'smem constant byte address 0x4 - core index']
  #allocation1 [shape = 'u32[144,128]{1,0:T(1,128)}', space=vmem, size = 0x12000, scoped, tag = 'internal scratch']
  %s0 = inlined_call_operand.hbm [shape: f32[16,32], index: 0, kind: input, shape index: {}]
  %s1 = inlined_call_operand.vmem [shape: f32[1,32], index: 1, kind: input, shape index: {}]
  %s2 = inlined_call_operand.vmem [shape: f32[1,32], index: 2, kind: input, shape index: {}]
  %s3 = inlined_call_operand.vmem [shape: f32[32,96], index: 3, kind: input, shape index: {}]
  %s4 = inlined_call_operand.vmem [shape: f32[1,96], index: 4, kind: input, shape index: {}]
  %s5 = inlined_call_operand.vmem [shape: f32[32,32], index: 5, kind: input, shape index: {}]
  %s6 = inlined_call_operand.vmem [shape: f32[1,32], index: 6, kind: input, shape index: {}]
  %s7 = inlined_call_operand.vmem [shape: f32[1,32], index: 7, kind: input, shape index: {}]
  %s8 = inlined_call_operand.vmem [shape: f32[1,32], index: 8, kind: input, shape index: {}]
  %s9 = inlined_call_operand.vmem [shape: f32[32,64], index: 9, kind: input, shape index: {}]
  %s10 = inlined_call_operand.vmem [shape: f32[1,64], index: 10, kind: input, shape index: {}]
  %s11 = inlined_call_operand.vmem [shape: f32[64,32], index: 11, kind: input, shape index: {}]
  %s12 = inlined_call_operand.vmem [shape: f32[1,32], index: 12, kind: input, shape index: {}]
  %s13 = inlined_call_operand.hbm [shape: f32[16,32], index: 13, kind: output, shape index: {}]
  %s14 = sld [smem:[#allocation0]]
  $region66: #{tpu_custom_call.1} parent=0
    _
  %s16 = ssub.s32 1, %s14
  %s17 = scalar_select 0, %s16, %s14
  $region1: #{tpu_custom_call.1} parent=0
    #allocation2 [shape = 'u8[8192]{0}', space=vmem, size = 0x2000, scoped, tag = 'input window, operand 0, single buffered']
    #allocation3 [shape = 's32[1]{0}', space=sflag, size = 0x4, scoped, tag = 'scoped memory for tpu_custom_call.1']
    #allocation4 [shape = 's32[1]{0}', space=sflag, size = 0x4, scoped, tag = 'scoped memory for tpu_custom_call.1']
    #allocation5 [shape = 'u8[8192]{0}', space=vmem, size = 0x2000, scoped, tag = 'output window, operand 0, single buffered']
    %18 = vsyncpa [#allocation3], 0
    %19 = vsyncpa [#allocation4], 0
    // Predicated region
    $region2: #{tpu_custom_call.1} parent=1 // pred_check
      _
    $region3: #{tpu_custom_call.1} parent=1 // pred_check_branch
      %21 = sbr.rel (0) target = $region5
    $region4: #{tpu_custom_call.1} parent=1 // pred_region
      %s23 = ssub.s32 256, 256
      %24 = vsyncadd [#allocation3], %s23
      %s25 = sshll.u32 [#allocation2], 4
      %s26 = int_to_ptr.vmem [resolvable:$true] %s25
      %31 = dma.hbm_to_vmem [thread:$0]  %s0, 256, %s26, [#allocation3], 128, 128, 8
    $region5: #{tpu_custom_call.1} parent=1 // pred_fallthru
      _
    // Predicated region
    $region6: #{tpu_custom_call.1} parent=1 // pred_check
      _
    $region7: #{tpu_custom_call.1} parent=1 // pred_check_branch
      %33 = sbr.rel (0) target = $region9
    $region8: #{tpu_custom_call.1} parent=1 // pred_region
      _
    $region9: #{tpu_custom_call.1} parent=1 // pred_fallthru
      _
    // Predicated region
    $region10: #{tpu_custom_call.1} parent=1 // pred_check
      _
    $region11: #{tpu_custom_call.1} parent=1 // pred_check_branch
      %35 = sbr.rel (0) target = $region13
    $region12: #{tpu_custom_call.1} parent=1 // pred_region
      _
    $region13: #{tpu_custom_call.1} parent=1 // pred_fallthru
      _
    // Predicated region
    $region14: #{tpu_custom_call.1} parent=1 // pred_check
      _
    $region15: #{tpu_custom_call.1} parent=1 // pred_check_branch
      %37 = sbr.rel (0) target = $region17
    $region16: #{tpu_custom_call.1} parent=1 // pred_region
      _
    $region17: #{tpu_custom_call.1} parent=1 // pred_fallthru
      _
    // Predicated region
    $region18: #{tpu_custom_call.1} parent=1 // pred_check
      _
    $region19: #{tpu_custom_call.1} parent=1 // pred_check_branch
      %39 = sbr.rel (0) target = $region21
    $region20: #{tpu_custom_call.1} parent=1 // pred_region
      _
    $region21: #{tpu_custom_call.1} parent=1 // pred_fallthru
      _
    // Predicated region
    $region22: #{tpu_custom_call.1} parent=1 // pred_check
      _
    $region23: #{tpu_custom_call.1} parent=1 // pred_check_branch
      %41 = sbr.rel (0) target = $region25
    $region24: #{tpu_custom_call.1} parent=1 // pred_region
      _
    $region25: #{tpu_custom_call.1} parent=1 // pred_fallthru
      _
    // Predicated region
    $region26: #{tpu_custom_call.1} parent=1 // pred_check
      _
    $region27: #{tpu_custom_call.1} parent=1 // pred_check_branch
      %43 = sbr.rel (0) target = $region29
    $region28: #{tpu_custom_call.1} parent=1 // pred_region
      _
    $region29: #{tpu_custom_call.1} parent=1 // pred_fallthru
      _
    // Predicated region
    $region30: #{tpu_custom_call.1} parent=1 // pred_check
      _
    $region31: #{tpu_custom_call.1} parent=1 // pred_check_branch
      %45 = sbr.rel (0) target = $region33
    $region32: #{tpu_custom_call.1} parent=1 // pred_region
      _
    $region33: #{tpu_custom_call.1} parent=1 // pred_fallthru
      _
    // Predicated region
    $region34: #{tpu_custom_call.1} parent=1 // pred_check
      _
    $region35: #{tpu_custom_call.1} parent=1 // pred_check_branch
      %47 = sbr.rel (0) target = $region37
    $region36: #{tpu_custom_call.1} parent=1 // pred_region
      _
    $region37: #{tpu_custom_call.1} parent=1 // pred_fallthru
      _
    // Predicated region
    $region38: #{tpu_custom_call.1} parent=1 // pred_check
      _
    $region39: #{tpu_custom_call.1} parent=1 // pred_check_branch
      %49 = sbr.rel (0) target = $region41
    $region40: #{tpu_custom_call.1} parent=1 // pred_region
      _
    $region41: #{tpu_custom_call.1} parent=1 // pred_fallthru
      _
    // Predicated region
    $region42: #{tpu_custom_call.1} parent=1 // pred_check
      _
    $region43: #{tpu_custom_call.1} parent=1 // pred_check_branch
      %51 = sbr.rel (0) target = $region45
    $region44: #{tpu_custom_call.1} parent=1 // pred_region
      _
    $region45: #{tpu_custom_call.1} parent=1 // pred_fallthru
      _
    // Predicated region
    $region46: #{tpu_custom_call.1} parent=1 // pred_check
      _
    $region47: #{tpu_custom_call.1} parent=1 // pred_check_branch
      %53 = sbr.rel (0) target = $region49
    $region48: #{tpu_custom_call.1} parent=1 // pred_region
      _
    $region49: #{tpu_custom_call.1} parent=1 // pred_fallthru
      _
    // Predicated region
    $region50: #{tpu_custom_call.1} parent=1 // pred_check
      _
    $region51: #{tpu_custom_call.1} parent=1 // pred_check_branch
      %55 = sbr.rel (0) target = $region53
    $region52: #{tpu_custom_call.1} parent=1 // pred_region
      _
    $region53: #{tpu_custom_call.1} parent=1 // pred_fallthru
      _
    // Predicated region
    $region54: #{tpu_custom_call.1} parent=1 // pred_check
      _
    $region55: #{tpu_custom_call.1} parent=1 // pred_check_branch
      %57 = sbr.rel (0) target = $region57
    $region56: #{tpu_custom_call.1} parent=1 // pred_region
      %58 = dma.done [#allocation3], 256
    $region57: #{tpu_custom_call.1} parent=1 // pred_fallthru
      _
    %v59 = vld [vmem:[#allocation2] sm:$0xff]
    %v60 = vld [vmem:[#allocation2 + $0x8] sm:$0xff]
    %v61 = vld [vmem:[%s1] sm:$0x1]
    %v62 = vld [vmem:[%s2] sm:$0x1]
    %vm63 = vcmask 261120
    %v64 = vsel %vm63, %v59, 0.0
    %65 = vadd.xlane.f32.xlu0 %v64
    %v66 = vpop.xlane.xlu0 %65
    %v67 = vsel %vm63, %v60, 0.0
    %68 = vadd.xlane.f32.xlu0 %v67
    %v69 = vpop.xlane.xlu0 %68
    %v70 = vrcp.pop 32.0
    %v71 = vmul.f32 %v66, %v70
    %v72 = vmul.f32 %v69, %v70
    %v73 = vsub.f32 %v59, %v71
    %v74 = vsub.f32 %v60, %v72
    %v75 = vmul.f32 %v73, %v73
    %v76 = vmul.f32 %v74, %v74
    %v77 = vsel %vm63, %v75, 0.0
    %78 = vadd.xlane.f32.xlu0 %v77
    %v79 = vpop.xlane.xlu0 %78
    %v80 = vsel %vm63, %v76, 0.0
    %81 = vadd.xlane.f32.xlu0 %v80
    %v82 = vpop.xlane.xlu0 %81
    %v83 = vmul.f32 %v79, %v70
    %v84 = vmul.f32 %v82, %v70
    %v85 = vadd.f32 %v83, 1e-05
    %v86 = vadd.f32 %v84, 1e-05
    %v87 = vrsqrt.pop %v85
    %v88 = vrsqrt.pop %v86
    %v89 = vmul.f32 %v73, %v87
    %v90 = vmul.f32 %v74, %v88
    %v92 = vlaneseq
    %v93 = vshrl.u32 %v92, 7
    %v94 = vsub.s32 0, %v93
    %v95 = vrot.slane %v61, %v94
    %v97 = vmul.f32 %v89, %v95
    %v98 = vmul.f32 %v90, %v95
    %v100 = vlaneseq
    %v101 = vshrl.u32 %v100, 7
    %v102 = vsub.s32 0, %v101
    %v103 = vrot.slane %v62, %v102
    %v105 = vadd.f32 %v97, %v103
    %v106 = vadd.f32 %v98, %v103
    %v107 = vld [vmem:[%s3] sm:$0xff]
    %v108 = vld [vmem:[%s3 + $0x8] sm:$0xff]
    %v109 = vld [vmem:[%s3 + $0x10] sm:$0xff]
    %v110 = vld [vmem:[%s3 + $0x18] sm:$0xff]
    %v111 = vld [vmem:[%s4] sm:$0x1]
    %v113 = vlaneseq
    %v114 = vshrl.u32 %v113, 7
    %v115 = vsub.s32 0, %v114
    %v116 = vrot.slane %v111, %v115
    %v119 = vsel %vm63, %v105, 0
    %v122 = vsel %vm63, %v106, 0
    %124 = vmatprep.subr.mxu0 0.0
    %125 = vmatpush1.msra.mxu0 0.0
    %126 = vmatprep.subr.mxu0 0.0
    %127 = vmatpush1.msra.mxu0 0.0
    %128 = vmatprep.subr.mxu0 0.0
    %129 = vmatpush1.msra.mxu0 0.0
    %130 = vmatprep.subr.mxu0 0.0
    %131 = vmatpush1.msra.mxu0 0.0
    %132 = vmatprep.subr.mxu0 0.0
    %133 = vmatpush1.msra.mxu0 0.0
    %134 = vmatprep.subr.mxu0 0.0
    %135 = vmatpush1.msra.mxu0 0.0
    %136 = vmatprep.subr.mxu0 0.0
    %137 = vmatpush1.msra.mxu0 0.0
    %138 = vmatprep.subr.mxu0 0.0
    %139 = vmatpush1.msra.mxu0 0.0
    %140 = vmatprep.subr.mxu0 0.0
    %141 = vmatpush1.msra.mxu0 0.0
    %142 = vmatprep.subr.mxu0 0.0
    %143 = vmatpush1.msra.mxu0 0.0
    %144 = vmatprep.subr.mxu0 0.0
    %145 = vmatpush1.msra.mxu0 0.0
    %146 = vmatprep.subr.mxu0 0.0
    %147 = vmatpush1.msra.mxu0 0.0
    %148 = vmatprep.subr.mxu0 0.0
    %149 = vmatpush1.msra.mxu0 %v110
    %150 = vmatprep.subr.mxu0 0.0
    %151 = vmatpush1.msra.mxu0 %v109
    %152 = vmatprep.subr.mxu0 0.0
    %153 = vmatpush1.msra.mxu0 %v108
    %154 = vmatprep.subr.mxu0 0.0
    %155 = vmatpush1.msra.mxu0 %v107
    %156 = vmatprep.subr.mxu0 0.0
    %157 = vmatpush2.msra.mxu0 0.0
    %158 = vmatprep.subr.mxu0 0.0
    %159 = vmatpush2.msra.mxu0 0.0
    %160 = vmatprep.subr.mxu0 0.0
    %161 = vmatpush2.msra.mxu0 0.0
    %162 = vmatprep.subr.mxu0 0.0
    %163 = vmatpush2.msra.mxu0 0.0
    %164 = vmatprep.subr.mxu0 0.0
    %165 = vmatpush2.msra.mxu0 0.0
    %166 = vmatprep.subr.mxu0 0.0
    %167 = vmatpush2.msra.mxu0 0.0
    %168 = vmatprep.subr.mxu0 0.0
    %169 = vmatpush2.msra.mxu0 0.0
    %170 = vmatprep.subr.mxu0 0.0
    %171 = vmatpush2.msra.mxu0 0.0
    %172 = vmatprep.subr.mxu0 0.0
    %173 = vmatpush2.msra.mxu0 0.0
    %174 = vmatprep.subr.mxu0 0.0
    %175 = vmatpush2.msra.mxu0 0.0
    %176 = vmatprep.subr.mxu0 0.0
    %177 = vmatpush2.msra.mxu0 0.0
    %178 = vmatprep.subr.mxu0 0.0
    %179 = vmatpush2.msra.mxu0 0.0
    %180 = vmatprep.subr.mxu0 0.0
    %181 = vmatpush2.msra.mxu0 0.0
    %182 = vmatprep.subr.mxu0 0.0
    %183 = vmatpush2.msra.mxu0 0.0
    %184 = vmatprep.subr.mxu0 0.0
    %185 = vmatpush2.msra.mxu0 0.0
    %186 = vmatprep.subr.mxu0 0.0
    %187 = vmatpush2.msra.mxu0 0.0
    %188 = vmatprep.mubr.f32.mxu0 0.0
    %189 = vmatmul.mubr.f32.gmra.mxu0 %v119
    %v190 = vpop.f32.mrf.mxu0
    %v191 = vadd.f32 %v116, %v190
    %v192 = vpop.f32.mrf.mxu0
    %193 = vmatprep.mubr.f32.mxu0 0.0
    %194 = vmatmul.mubr.f32.gmra.mxu0 %v122
    %v195 = vpop.f32.mrf.mxu0
    %v196 = vadd.f32 %v116, %v195
    %v197 = vpop.f32.mrf.mxu0
    %198 = vdwg.mxu0
    %v199 = vlaneseq
    %v200 = vshrl.u32 %v199, 7
    %v201 = vadd.s32 %v200, 8
    %v202 = vlaneseq
    %v203 = vand.u32 %v202, 127
    %vm204 = vcmp.lt.s32.totalorder %v200, 0
    %v205 = vsub.s32 0, %v200
    %v206 = vsel %vm204, %v205, %v200
    %v207 = vshrl.u32 %v206, 1
    %v208 = vand.u32 %v206, 1
    %v209 = vsub.s32 0, %v208
    %v210 = vsel %vm204, %v209, %v208
    %vm211 = vcmp.lt.s32.totalorder %v201, 0
    %v212 = vsub.s32 0, %v201
    %v213 = vsel %vm211, %v212, %v201
    %v214 = vshrl.u32 %v213, 1
    %v215 = vand.u32 %v213, 1
    %v216 = vsub.s32 0, %v215
    %v217 = vsel %vm211, %v216, %v215
    %vm218 = vcmp.ne.s32.totalorder %v210, 0
    %vm219 = vcmp.ne.s32.totalorder %v217, 0
    %vm220 = vcmp.lt.s32.totalorder %v210, 0
    %vm221 = vcmp.lt.s32.totalorder %v217, 0
    %vm222 = vmand %vm220, %vm218
    %vm223 = vmand %vm221, %vm219
    %v224 = vadd.s32 %v210, 2
    %v225 = vadd.s32 %v217, 2
    %v226 = vsel %vm222, %v224, %v210
    %v227 = vsel %vm223, %v225, %v217
    %vm228 = vcmp.lt.s32.totalorder %v203, 0
    %v229 = vsub.s32 0, %v203
    %v230 = vsel %vm228, %v229, %v203
    %v231 = vshrl.u32 %v230, 1
    %v232 = vand.u32 %v230, 1
    %v233 = vsub.s32 0, %v232
    %v234 = vsel %vm228, %v233, %v232
    %vm235 = vcmp.ne.s32.totalorder %v234, 0
    %vm236 = vcmp.lt.s32.totalorder %v234, 0
    %vm237 = vmand %vm236, %vm235
    %v238 = vadd.s32 %v234, 2
    %v239 = vsel %vm237, %v238, %v234
    %vm240 = vcmp.eq.s32.totalorder %v226, %v239
    %vm241 = vcmp.eq.s32.totalorder %v227, %v239
    %244 = vrot.lane.b32.xlu0 %v191, 96
    %v245 = vpop.permute.xlu0 %244
    %246 = vrot.lane.b32.xlu0 %v196, 96
    %v247 = vpop.permute.xlu0 %246
    %vm248 = vcmask 64512
    %v249 = vsel %vm248, %v191, 0
    %v251 = vsel %vm248, %v196, 0
    %v253 = vsel %vm248, %v245, 0
    %v255 = vsel %vm248, %v247, 0
    %257 = vmatprep.subr.mxu0 0.0
    %258 = vmatpush1.xpose.msra.mxu0 0.0
    %259 = vmatprep.subr.mxu0 0.0
    %260 = vmatpush1.xpose.msra.mxu0 0.0
    %261 = vmatprep.subr.mxu0 0.0
    %262 = vmatpush1.xpose.msra.mxu0 0.0
    %263 = vmatprep.subr.mxu0 0.0
    %264 = vmatpush1.xpose.msra.mxu0 0.0
    %265 = vmatprep.subr.mxu0 0.0
    %266 = vmatpush1.xpose.msra.mxu0 0.0
    %267 = vmatprep.subr.mxu0 0.0
    %268 = vmatpush1.xpose.msra.mxu0 0.0
    %269 = vmatprep.subr.mxu0 0.0
    %270 = vmatpush1.xpose.msra.mxu0 0.0
    %271 = vmatprep.subr.mxu0 0.0
    %272 = vmatpush1.xpose.msra.mxu0 0.0
    %273 = vmatprep.subr.mxu0 0.0
    %274 = vmatpush1.xpose.msra.mxu0 0.0
    %275 = vmatprep.subr.mxu0 0.0
    %276 = vmatpush1.xpose.msra.mxu0 0.0
    %277 = vmatprep.subr.mxu0 0.0
    %278 = vmatpush1.xpose.msra.mxu0 0.0
    %279 = vmatprep.subr.mxu0 0.0
    %280 = vmatpush1.xpose.msra.mxu0 0.0
    %281 = vmatprep.subr.mxu0 0.0
    %282 = vmatpush1.xpose.msra.mxu0 0.0
    %283 = vmatprep.subr.mxu0 0.0
    %284 = vmatpush1.xpose.msra.mxu0 0.0
    %285 = vmatprep.subr.mxu0 0.0
    %286 = vmatpush1.xpose.msra.mxu0 %v255
    %287 = vmatprep.subr.mxu0 0.0
    %288 = vmatpush1.xpose.msra.mxu0 %v253
    %289 = vmatprep.subr.mxu0 0.0
    %290 = vmatpush2.xpose.msra.mxu0 0.0
    %291 = vmatprep.subr.mxu0 0.0
    %292 = vmatpush2.xpose.msra.mxu0 0.0
    %293 = vmatprep.subr.mxu0 0.0
    %294 = vmatpush2.xpose.msra.mxu0 0.0
    %295 = vmatprep.subr.mxu0 0.0
    %296 = vmatpush2.xpose.msra.mxu0 0.0
    %297 = vmatprep.subr.mxu0 0.0
    %298 = vmatpush2.xpose.msra.mxu0 0.0
    %299 = vmatprep.subr.mxu0 0.0
    %300 = vmatpush2.xpose.msra.mxu0 0.0
    %301 = vmatprep.subr.mxu0 0.0
    %302 = vmatpush2.xpose.msra.mxu0 0.0
    %303 = vmatprep.subr.mxu0 0.0
    %304 = vmatpush2.xpose.msra.mxu0 0.0
    %305 = vmatprep.subr.mxu0 0.0
    %306 = vmatpush2.xpose.msra.mxu0 0.0
    %307 = vmatprep.subr.mxu0 0.0
    %308 = vmatpush2.xpose.msra.mxu0 0.0
    %309 = vmatprep.subr.mxu0 0.0
    %310 = vmatpush2.xpose.msra.mxu0 0.0
    %311 = vmatprep.subr.mxu0 0.0
    %312 = vmatpush2.xpose.msra.mxu0 0.0
    %313 = vmatprep.subr.mxu0 0.0
    %314 = vmatpush2.xpose.msra.mxu0 0.0
    %315 = vmatprep.subr.mxu0 0.0
    %316 = vmatpush2.xpose.msra.mxu0 0.0
    %317 = vmatprep.subr.mxu0 0.0
    %318 = vmatpush2.xpose.msra.mxu0 0.0
    %319 = vmatprep.subr.mxu0 0.0
    %320 = vmatpush2.xpose.msra.mxu0 0.0
    %321 = vmatprep.mubr.f32.mxu0 0.0
    %322 = vmatmul.mubr.f32.gmra.mxu0 %v249
    %v323 = vpop.f32.mrf.mxu0
    %v324 = vadd.f32 0.0, %v323
    %v325 = vpop.f32.mrf.mxu0
    %326 = vmatprep.mubr.f32.mxu0 0.0
    %327 = vmatmul.mubr.f32.gmra.mxu0 %v251
    %v328 = vpop.f32.mrf.mxu0
    %v329 = vadd.f32 0.0, %v328
    %v330 = vpop.f32.mrf.mxu0
    %331 = vdwg.mxu0
    %v332 = vsel %vm240, %v324, -1e+30
    %v333 = vsel %vm241, %v329, -1e+30
    %vm334 = vcmask 130048
    %v335 = vsel %vm334, %v332, -inf
    %336 = vmax.xlane.f32.xlu0 %v335
    %v337 = vpop.xlane.xlu0 %336
    %v338 = vsel %vm334, %v333, -inf
    %339 = vmax.xlane.f32.xlu0 %v338
    %v340 = vpop.xlane.xlu0 %339
    %v341 = vsub.f32 %v332, %v337
    %v342 = vsub.f32 %v333, %v340
    %v343 = vmul.f32 %v341, 1.442695
    %v344 = vpow.pop %v343
    %v345 = vmul.f32 %v342, 1.442695
    %v346 = vpow.pop %v345
    %v347 = vsel %vm334, %v344, 0.0
    %348 = vadd.xlane.f32.xlu0 %v347
    %v349 = vpop.xlane.xlu0 %348
    %v350 = vsel %vm334, %v346, 0.0
    %351 = vadd.xlane.f32.xlu0 %v350
    %v352 = vpop.xlane.xlu0 %351
    %v353 = vrcp.pop %v349
    %v354 = vrcp.pop %v352
    %v355 = vmul.f32 %v344, %v353
    %v356 = vmul.f32 %v346, %v354
    %357 = vrot.lane.b32.xlu0 %v191, 64
    %v358 = vpop.permute.xlu0 %357
    %359 = vrot.lane.b32.xlu0 %v196, 64
    %v360 = vpop.permute.xlu0 %359
    %v364 = vsel %vm334, %v355, 0
    %v367 = vsel %vm334, %v356, 0
    %369 = vmatprep.subr.mxu0 0.0
    %370 = vmatpush1.msra.mxu0 0.0
    %371 = vmatprep.subr.mxu0 0.0
    %372 = vmatpush1.msra.mxu0 0.0
    %373 = vmatprep.subr.mxu0 0.0
    %374 = vmatpush1.msra.mxu0 0.0
    %375 = vmatprep.subr.mxu0 0.0
    %376 = vmatpush1.msra.mxu0 0.0
    %377 = vmatprep.subr.mxu0 0.0
    %378 = vmatpush1.msra.mxu0 0.0
    %379 = vmatprep.subr.mxu0 0.0
    %380 = vmatpush1.msra.mxu0 0.0
    %381 = vmatprep.subr.mxu0 0.0
    %382 = vmatpush1.msra.mxu0 0.0
    %383 = vmatprep.subr.mxu0 0.0
    %384 = vmatpush1.msra.mxu0 0.0
    %385 = vmatprep.subr.mxu0 0.0
    %386 = vmatpush1.msra.mxu0 0.0
    %387 = vmatprep.subr.mxu0 0.0
    %388 = vmatpush1.msra.mxu0 0.0
    %389 = vmatprep.subr.mxu0 0.0
    %390 = vmatpush1.msra.mxu0 0.0
    %391 = vmatprep.subr.mxu0 0.0
    %392 = vmatpush1.msra.mxu0 0.0
    %393 = vmatprep.subr.mxu0 0.0
    %394 = vmatpush1.msra.mxu0 0.0
    %395 = vmatprep.subr.mxu0 0.0
    %396 = vmatpush1.msra.mxu0 0.0
    %397 = vmatprep.subr.mxu0 0.0
    %398 = vmatpush1.msra.mxu0 %v360
    %399 = vmatprep.subr.mxu0 0.0
    %400 = vmatpush1.msra.mxu0 %v358
    %401 = vmatprep.subr.mxu0 0.0
    %402 = vmatpush2.msra.mxu0 0.0
    %403 = vmatprep.subr.mxu0 0.0
    %404 = vmatpush2.msra.mxu0 0.0
    %405 = vmatprep.subr.mxu0 0.0
    %406 = vmatpush2.msra.mxu0 0.0
    %407 = vmatprep.subr.mxu0 0.0
    %408 = vmatpush2.msra.mxu0 0.0
    %409 = vmatprep.subr.mxu0 0.0
    %410 = vmatpush2.msra.mxu0 0.0
    %411 = vmatprep.subr.mxu0 0.0
    %412 = vmatpush2.msra.mxu0 0.0
    %413 = vmatprep.subr.mxu0 0.0
    %414 = vmatpush2.msra.mxu0 0.0
    %415 = vmatprep.subr.mxu0 0.0
    %416 = vmatpush2.msra.mxu0 0.0
    %417 = vmatprep.subr.mxu0 0.0
    %418 = vmatpush2.msra.mxu0 0.0
    %419 = vmatprep.subr.mxu0 0.0
    %420 = vmatpush2.msra.mxu0 0.0
    %421 = vmatprep.subr.mxu0 0.0
    %422 = vmatpush2.msra.mxu0 0.0
    %423 = vmatprep.subr.mxu0 0.0
    %424 = vmatpush2.msra.mxu0 0.0
    %425 = vmatprep.subr.mxu0 0.0
    %426 = vmatpush2.msra.mxu0 0.0
    %427 = vmatprep.subr.mxu0 0.0
    %428 = vmatpush2.msra.mxu0 0.0
    %429 = vmatprep.subr.mxu0 0.0
    %430 = vmatpush2.msra.mxu0 0.0
    %431 = vmatprep.subr.mxu0 0.0
    %432 = vmatpush2.msra.mxu0 0.0
    %433 = vmatprep.mubr.f32.mxu0 0.0
    %434 = vmatmul.mubr.f32.gmra.mxu0 %v364
    %v435 = vpop.f32.mrf.mxu0
    %v436 = vadd.f32 0.0, %v435
    %v437 = vpop.f32.mrf.mxu0
    %438 = vmatprep.mubr.f32.mxu0 0.0
    %439 = vmatmul.mubr.f32.gmra.mxu0 %v367
    %v440 = vpop.f32.mrf.mxu0
    %v441 = vadd.f32 0.0, %v440
    %v442 = vpop.f32.mrf.mxu0
    %443 = vdwg.mxu0
    %444 = vrot.lane.b32.xlu0 %v191, 120
    %v445 = vpop.permute.xlu0 %444
    %446 = vrot.lane.b32.xlu0 %v196, 120
    %v447 = vpop.permute.xlu0 %446
    %448 = vrot.lane.b32.xlu0 %v191, 88
    %v449 = vpop.permute.xlu0 %448
    %450 = vrot.lane.b32.xlu0 %v196, 88
    %v451 = vpop.permute.xlu0 %450
    %v452 = vsel %vm248, %v445, 0
    %v454 = vsel %vm248, %v447, 0
    %v456 = vsel %vm248, %v449, 0
    %v458 = vsel %vm248, %v451, 0
    %460 = vmatprep.subr.mxu0 0.0
    %461 = vmatpush1.xpose.msra.mxu0 0.0
    %462 = vmatprep.subr.mxu0 0.0
    %463 = vmatpush1.xpose.msra.mxu0 0.0
    %464 = vmatprep.subr.mxu0 0.0
    %465 = vmatpush1.xpose.msra.mxu0 0.0
    %466 = vmatprep.subr.mxu0 0.0
    %467 = vmatpush1.xpose.msra.mxu0 0.0
    %468 = vmatprep.subr.mxu0 0.0
    %469 = vmatpush1.xpose.msra.mxu0 0.0
    %470 = vmatprep.subr.mxu0 0.0
    %471 = vmatpush1.xpose.msra.mxu0 0.0
    %472 = vmatprep.subr.mxu0 0.0
    %473 = vmatpush1.xpose.msra.mxu0 0.0
    %474 = vmatprep.subr.mxu0 0.0
    %475 = vmatpush1.xpose.msra.mxu0 0.0
    %476 = vmatprep.subr.mxu0 0.0
    %477 = vmatpush1.xpose.msra.mxu0 0.0
    %478 = vmatprep.subr.mxu0 0.0
    %479 = vmatpush1.xpose.msra.mxu0 0.0
    %480 = vmatprep.subr.mxu0 0.0
    %481 = vmatpush1.xpose.msra.mxu0 0.0
    %482 = vmatprep.subr.mxu0 0.0
    %483 = vmatpush1.xpose.msra.mxu0 0.0
    %484 = vmatprep.subr.mxu0 0.0
    %485 = vmatpush1.xpose.msra.mxu0 0.0
    %486 = vmatprep.subr.mxu0 0.0
    %487 = vmatpush1.xpose.msra.mxu0 0.0
    %488 = vmatprep.subr.mxu0 0.0
    %489 = vmatpush1.xpose.msra.mxu0 %v458
    %490 = vmatprep.subr.mxu0 0.0
    %491 = vmatpush1.xpose.msra.mxu0 %v456
    %492 = vmatprep.subr.mxu0 0.0
    %493 = vmatpush2.xpose.msra.mxu0 0.0
    %494 = vmatprep.subr.mxu0 0.0
    %495 = vmatpush2.xpose.msra.mxu0 0.0
    %496 = vmatprep.subr.mxu0 0.0
    %497 = vmatpush2.xpose.msra.mxu0 0.0
    %498 = vmatprep.subr.mxu0 0.0
    %499 = vmatpush2.xpose.msra.mxu0 0.0
    %500 = vmatprep.subr.mxu0 0.0
    %501 = vmatpush2.xpose.msra.mxu0 0.0
    %502 = vmatprep.subr.mxu0 0.0
    %503 = vmatpush2.xpose.msra.mxu0 0.0
    %504 = vmatprep.subr.mxu0 0.0
    %505 = vmatpush2.xpose.msra.mxu0 0.0
    %506 = vmatprep.subr.mxu0 0.0
    %507 = vmatpush2.xpose.msra.mxu0 0.0
    %508 = vmatprep.subr.mxu0 0.0
    %509 = vmatpush2.xpose.msra.mxu0 0.0
    %510 = vmatprep.subr.mxu0 0.0
    %511 = vmatpush2.xpose.msra.mxu0 0.0
    %512 = vmatprep.subr.mxu0 0.0
    %513 = vmatpush2.xpose.msra.mxu0 0.0
    %514 = vmatprep.subr.mxu0 0.0
    %515 = vmatpush2.xpose.msra.mxu0 0.0
    %516 = vmatprep.subr.mxu0 0.0
    %517 = vmatpush2.xpose.msra.mxu0 0.0
    %518 = vmatprep.subr.mxu0 0.0
    %519 = vmatpush2.xpose.msra.mxu0 0.0
    %520 = vmatprep.subr.mxu0 0.0
    %521 = vmatpush2.xpose.msra.mxu0 0.0
    %522 = vmatprep.subr.mxu0 0.0
    %523 = vmatpush2.xpose.msra.mxu0 0.0
    %524 = vmatprep.mubr.f32.mxu0 0.0
    %525 = vmatmul.mubr.f32.gmra.mxu0 %v452
    %v526 = vpop.f32.mrf.mxu0
    %v527 = vadd.f32 0.0, %v526
    %v528 = vpop.f32.mrf.mxu0
    %529 = vmatprep.mubr.f32.mxu0 0.0
    %530 = vmatmul.mubr.f32.gmra.mxu0 %v454
    %v531 = vpop.f32.mrf.mxu0
    %v532 = vadd.f32 0.0, %v531
    %v533 = vpop.f32.mrf.mxu0
    %534 = vdwg.mxu0
    %v535 = vsel %vm240, %v527, -1e+30
    %v536 = vsel %vm241, %v532, -1e+30
    %v537 = vsel %vm334, %v535, -inf
    %538 = vmax.xlane.f32.xlu0 %v537
    %v539 = vpop.xlane.xlu0 %538
    %v540 = vsel %vm334, %v536, -inf
    %541 = vmax.xlane.f32.xlu0 %v540
    %v542 = vpop.xlane.xlu0 %541
    %v543 = vsub.f32 %v535, %v539
    %v544 = vsub.f32 %v536, %v542
    %v545 = vmul.f32 %v543, 1.442695
    %v546 = vpow.pop %v545
    %v547 = vmul.f32 %v544, 1.442695
    %v548 = vpow.pop %v547
    %v549 = vsel %vm334, %v546, 0.0
    %550 = vadd.xlane.f32.xlu0 %v549
    %v551 = vpop.xlane.xlu0 %550
    %v552 = vsel %vm334, %v548, 0.0
    %553 = vadd.xlane.f32.xlu0 %v552
    %v554 = vpop.xlane.xlu0 %553
    %v555 = vrcp.pop %v551
    %v556 = vrcp.pop %v554
    %v557 = vmul.f32 %v546, %v555
    %v558 = vmul.f32 %v548, %v556
    %559 = vrot.lane.b32.xlu0 %v191, 56
    %v560 = vpop.permute.xlu0 %559
    %561 = vrot.lane.b32.xlu0 %v196, 56
    %v562 = vpop.permute.xlu0 %561
    %v566 = vsel %vm334, %v557, 0
    %v569 = vsel %vm334, %v558, 0
    %571 = vmatprep.subr.mxu0 0.0
    %572 = vmatpush1.msra.mxu0 0.0
    %573 = vmatprep.subr.mxu0 0.0
    %574 = vmatpush1.msra.mxu0 0.0
    %575 = vmatprep.subr.mxu0 0.0
    %576 = vmatpush1.msra.mxu0 0.0
    %577 = vmatprep.subr.mxu0 0.0
    %578 = vmatpush1.msra.mxu0 0.0
    %579 = vmatprep.subr.mxu0 0.0
    %580 = vmatpush1.msra.mxu0 0.0
    %581 = vmatprep.subr.mxu0 0.0
    %582 = vmatpush1.msra.mxu0 0.0
    %583 = vmatprep.subr.mxu0 0.0
    %584 = vmatpush1.msra.mxu0 0.0
    %585 = vmatprep.subr.mxu0 0.0
    %586 = vmatpush1.msra.mxu0 0.0
    %587 = vmatprep.subr.mxu0 0.0
    %588 = vmatpush1.msra.mxu0 0.0
    %589 = vmatprep.subr.mxu0 0.0
    %590 = vmatpush1.msra.mxu0 0.0
    %591 = vmatprep.subr.mxu0 0.0
    %592 = vmatpush1.msra.mxu0 0.0
    %593 = vmatprep.subr.mxu0 0.0
    %594 = vmatpush1.msra.mxu0 0.0
    %595 = vmatprep.subr.mxu0 0.0
    %596 = vmatpush1.msra.mxu0 0.0
    %597 = vmatprep.subr.mxu0 0.0
    %598 = vmatpush1.msra.mxu0 0.0
    %599 = vmatprep.subr.mxu0 0.0
    %600 = vmatpush1.msra.mxu0 %v562
    %601 = vmatprep.subr.mxu0 0.0
    %602 = vmatpush1.msra.mxu0 %v560
    %603 = vmatprep.subr.mxu0 0.0
    %604 = vmatpush2.msra.mxu0 0.0
    %605 = vmatprep.subr.mxu0 0.0
    %606 = vmatpush2.msra.mxu0 0.0
    %607 = vmatprep.subr.mxu0 0.0
    %608 = vmatpush2.msra.mxu0 0.0
    %609 = vmatprep.subr.mxu0 0.0
    %610 = vmatpush2.msra.mxu0 0.0
    %611 = vmatprep.subr.mxu0 0.0
    %612 = vmatpush2.msra.mxu0 0.0
    %613 = vmatprep.subr.mxu0 0.0
    %614 = vmatpush2.msra.mxu0 0.0
    %615 = vmatprep.subr.mxu0 0.0
    %616 = vmatpush2.msra.mxu0 0.0
    %617 = vmatprep.subr.mxu0 0.0
    %618 = vmatpush2.msra.mxu0 0.0
    %619 = vmatprep.subr.mxu0 0.0
    %620 = vmatpush2.msra.mxu0 0.0
    %621 = vmatprep.subr.mxu0 0.0
    %622 = vmatpush2.msra.mxu0 0.0
    %623 = vmatprep.subr.mxu0 0.0
    %624 = vmatpush2.msra.mxu0 0.0
    %625 = vmatprep.subr.mxu0 0.0
    %626 = vmatpush2.msra.mxu0 0.0
    %627 = vmatprep.subr.mxu0 0.0
    %628 = vmatpush2.msra.mxu0 0.0
    %629 = vmatprep.subr.mxu0 0.0
    %630 = vmatpush2.msra.mxu0 0.0
    %631 = vmatprep.subr.mxu0 0.0
    %632 = vmatpush2.msra.mxu0 0.0
    %633 = vmatprep.subr.mxu0 0.0
    %634 = vmatpush2.msra.mxu0 0.0
    %635 = vmatprep.mubr.f32.mxu0 0.0
    %636 = vmatmul.mubr.f32.gmra.mxu0 %v566
    %v637 = vpop.f32.mrf.mxu0
    %v638 = vadd.f32 0.0, %v637
    %v639 = vpop.f32.mrf.mxu0
    %640 = vmatprep.mubr.f32.mxu0 0.0
    %641 = vmatmul.mubr.f32.gmra.mxu0 %v569
    %v642 = vpop.f32.mrf.mxu0
    %v643 = vadd.f32 0.0, %v642
    %v644 = vpop.f32.mrf.mxu0
    %645 = vdwg.mxu0
    %646 = vrot.lane.b32.xlu0 %v191, 112
    %v647 = vpop.permute.xlu0 %646
    %648 = vrot.lane.b32.xlu0 %v196, 112
    %v649 = vpop.permute.xlu0 %648
    %650 = vrot.lane.b32.xlu0 %v191, 80
    %v651 = vpop.permute.xlu0 %650
    %652 = vrot.lane.b32.xlu0 %v196, 80
    %v653 = vpop.permute.xlu0 %652
    %v654 = vsel %vm248, %v647, 0
    %v656 = vsel %vm248, %v649, 0
    %v658 = vsel %vm248, %v651, 0
    %v660 = vsel %vm248, %v653, 0
    %662 = vmatprep.subr.mxu0 0.0
    %663 = vmatpush1.xpose.msra.mxu0 0.0
    %664 = vmatprep.subr.mxu0 0.0
    %665 = vmatpush1.xpose.msra.mxu0 0.0
    %666 = vmatprep.subr.mxu0 0.0
    %667 = vmatpush1.xpose.msra.mxu0 0.0
    %668 = vmatprep.subr.mxu0 0.0
    %669 = vmatpush1.xpose.msra.mxu0 0.0
    %670 = vmatprep.subr.mxu0 0.0
    %671 = vmatpush1.xpose.msra.mxu0 0.0
    %672 = vmatprep.subr.mxu0 0.0
    %673 = vmatpush1.xpose.msra.mxu0 0.0
    %674 = vmatprep.subr.mxu0 0.0
    %675 = vmatpush1.xpose.msra.mxu0 0.0
    %676 = vmatprep.subr.mxu0 0.0
    %677 = vmatpush1.xpose.msra.mxu0 0.0
    %678 = vmatprep.subr.mxu0 0.0
    %679 = vmatpush1.xpose.msra.mxu0 0.0
    %680 = vmatprep.subr.mxu0 0.0
    %681 = vmatpush1.xpose.msra.mxu0 0.0
    %682 = vmatprep.subr.mxu0 0.0
    %683 = vmatpush1.xpose.msra.mxu0 0.0
    %684 = vmatprep.subr.mxu0 0.0
    %685 = vmatpush1.xpose.msra.mxu0 0.0
    %686 = vmatprep.subr.mxu0 0.0
    %687 = vmatpush1.xpose.msra.mxu0 0.0
    %688 = vmatprep.subr.mxu0 0.0
    %689 = vmatpush1.xpose.msra.mxu0 0.0
    %690 = vmatprep.subr.mxu0 0.0
    %691 = vmatpush1.xpose.msra.mxu0 %v660
    %692 = vmatprep.subr.mxu0 0.0
    %693 = vmatpush1.xpose.msra.mxu0 %v658
    %694 = vmatprep.subr.mxu0 0.0
    %695 = vmatpush2.xpose.msra.mxu0 0.0
    %696 = vmatprep.subr.mxu0 0.0
    %697 = vmatpush2.xpose.msra.mxu0 0.0
    %698 = vmatprep.subr.mxu0 0.0
    %699 = vmatpush2.xpose.msra.mxu0 0.0
    %700 = vmatprep.subr.mxu0 0.0
    %701 = vmatpush2.xpose.msra.mxu0 0.0
    %702 = vmatprep.subr.mxu0 0.0
    %703 = vmatpush2.xpose.msra.mxu0 0.0
    %704 = vmatprep.subr.mxu0 0.0
    %705 = vmatpush2.xpose.msra.mxu0 0.0
    %706 = vmatprep.subr.mxu0 0.0
    %707 = vmatpush2.xpose.msra.mxu0 0.0
    %708 = vmatprep.subr.mxu0 0.0
    %709 = vmatpush2.xpose.msra.mxu0 0.0
    %710 = vmatprep.subr.mxu0 0.0
    %711 = vmatpush2.xpose.msra.mxu0 0.0
    %712 = vmatprep.subr.mxu0 0.0
    %713 = vmatpush2.xpose.msra.mxu0 0.0
    %714 = vmatprep.subr.mxu0 0.0
    %715 = vmatpush2.xpose.msra.mxu0 0.0
    %716 = vmatprep.subr.mxu0 0.0
    %717 = vmatpush2.xpose.msra.mxu0 0.0
    %718 = vmatprep.subr.mxu0 0.0
    %719 = vmatpush2.xpose.msra.mxu0 0.0
    %720 = vmatprep.subr.mxu0 0.0
    %721 = vmatpush2.xpose.msra.mxu0 0.0
    %722 = vmatprep.subr.mxu0 0.0
    %723 = vmatpush2.xpose.msra.mxu0 0.0
    %724 = vmatprep.subr.mxu0 0.0
    %725 = vmatpush2.xpose.msra.mxu0 0.0
    %726 = vmatprep.mubr.f32.mxu0 0.0
    %727 = vmatmul.mubr.f32.gmra.mxu0 %v654
    %v728 = vpop.f32.mrf.mxu0
    %v729 = vadd.f32 0.0, %v728
    %v730 = vpop.f32.mrf.mxu0
    %731 = vmatprep.mubr.f32.mxu0 0.0
    %732 = vmatmul.mubr.f32.gmra.mxu0 %v656
    %v733 = vpop.f32.mrf.mxu0
    %v734 = vadd.f32 0.0, %v733
    %v735 = vpop.f32.mrf.mxu0
    %736 = vdwg.mxu0
    %v737 = vsel %vm240, %v729, -1e+30
    %v738 = vsel %vm241, %v734, -1e+30
    %v739 = vsel %vm334, %v737, -inf
    %740 = vmax.xlane.f32.xlu0 %v739
    %v741 = vpop.xlane.xlu0 %740
    %v742 = vsel %vm334, %v738, -inf
    %743 = vmax.xlane.f32.xlu0 %v742
    %v744 = vpop.xlane.xlu0 %743
    %v745 = vsub.f32 %v737, %v741
    %v746 = vsub.f32 %v738, %v744
    %v747 = vmul.f32 %v745, 1.442695
    %v748 = vpow.pop %v747
    %v749 = vmul.f32 %v746, 1.442695
    %v750 = vpow.pop %v749
    %v751 = vsel %vm334, %v748, 0.0
    %752 = vadd.xlane.f32.xlu0 %v751
    %v753 = vpop.xlane.xlu0 %752
    %v754 = vsel %vm334, %v750, 0.0
    %755 = vadd.xlane.f32.xlu0 %v754
    %v756 = vpop.xlane.xlu0 %755
    %v757 = vrcp.pop %v753
    %v758 = vrcp.pop %v756
    %v759 = vmul.f32 %v748, %v757
    %v760 = vmul.f32 %v750, %v758
    %761 = vrot.lane.b32.xlu0 %v191, 48
    %v762 = vpop.permute.xlu0 %761
    %763 = vrot.lane.b32.xlu0 %v196, 48
    %v764 = vpop.permute.xlu0 %763
    %v768 = vsel %vm334, %v759, 0
    %v771 = vsel %vm334, %v760, 0
    %773 = vmatprep.subr.mxu0 0.0
    %774 = vmatpush1.msra.mxu0 0.0
    %775 = vmatprep.subr.mxu0 0.0
    %776 = vmatpush1.msra.mxu0 0.0
    %777 = vmatprep.subr.mxu0 0.0
    %778 = vmatpush1.msra.mxu0 0.0
    %779 = vmatprep.subr.mxu0 0.0
    %780 = vmatpush1.msra.mxu0 0.0
    %781 = vmatprep.subr.mxu0 0.0
    %782 = vmatpush1.msra.mxu0 0.0
    %783 = vmatprep.subr.mxu0 0.0
    %784 = vmatpush1.msra.mxu0 0.0
    %785 = vmatprep.subr.mxu0 0.0
    %786 = vmatpush1.msra.mxu0 0.0
    %787 = vmatprep.subr.mxu0 0.0
    %788 = vmatpush1.msra.mxu0 0.0
    %789 = vmatprep.subr.mxu0 0.0
    %790 = vmatpush1.msra.mxu0 0.0
    %791 = vmatprep.subr.mxu0 0.0
    %792 = vmatpush1.msra.mxu0 0.0
    %793 = vmatprep.subr.mxu0 0.0
    %794 = vmatpush1.msra.mxu0 0.0
    %795 = vmatprep.subr.mxu0 0.0
    %796 = vmatpush1.msra.mxu0 0.0
    %797 = vmatprep.subr.mxu0 0.0
    %798 = vmatpush1.msra.mxu0 0.0
    %799 = vmatprep.subr.mxu0 0.0
    %800 = vmatpush1.msra.mxu0 0.0
    %801 = vmatprep.subr.mxu0 0.0
    %802 = vmatpush1.msra.mxu0 %v764
    %803 = vmatprep.subr.mxu0 0.0
    %804 = vmatpush1.msra.mxu0 %v762
    %805 = vmatprep.subr.mxu0 0.0
    %806 = vmatpush2.msra.mxu0 0.0
    %807 = vmatprep.subr.mxu0 0.0
    %808 = vmatpush2.msra.mxu0 0.0
    %809 = vmatprep.subr.mxu0 0.0
    %810 = vmatpush2.msra.mxu0 0.0
    %811 = vmatprep.subr.mxu0 0.0
    %812 = vmatpush2.msra.mxu0 0.0
    %813 = vmatprep.subr.mxu0 0.0
    %814 = vmatpush2.msra.mxu0 0.0
    %815 = vmatprep.subr.mxu0 0.0
    %816 = vmatpush2.msra.mxu0 0.0
    %817 = vmatprep.subr.mxu0 0.0
    %818 = vmatpush2.msra.mxu0 0.0
    %819 = vmatprep.subr.mxu0 0.0
    %820 = vmatpush2.msra.mxu0 0.0
    %821 = vmatprep.subr.mxu0 0.0
    %822 = vmatpush2.msra.mxu0 0.0
    %823 = vmatprep.subr.mxu0 0.0
    %824 = vmatpush2.msra.mxu0 0.0
    %825 = vmatprep.subr.mxu0 0.0
    %826 = vmatpush2.msra.mxu0 0.0
    %827 = vmatprep.subr.mxu0 0.0
    %828 = vmatpush2.msra.mxu0 0.0
    %829 = vmatprep.subr.mxu0 0.0
    %830 = vmatpush2.msra.mxu0 0.0
    %831 = vmatprep.subr.mxu0 0.0
    %832 = vmatpush2.msra.mxu0 0.0
    %833 = vmatprep.subr.mxu0 0.0
    %834 = vmatpush2.msra.mxu0 0.0
    %835 = vmatprep.subr.mxu0 0.0
    %836 = vmatpush2.msra.mxu0 0.0
    %837 = vmatprep.mubr.f32.mxu0 0.0
    %838 = vmatmul.mubr.f32.gmra.mxu0 %v768
    %v839 = vpop.f32.mrf.mxu0
    %v840 = vadd.f32 0.0, %v839
    %v841 = vpop.f32.mrf.mxu0
    %842 = vmatprep.mubr.f32.mxu0 0.0
    %843 = vmatmul.mubr.f32.gmra.mxu0 %v771
    %v844 = vpop.f32.mrf.mxu0
    %v845 = vadd.f32 0.0, %v844
    %v846 = vpop.f32.mrf.mxu0
    %847 = vdwg.mxu0
    %848 = vrot.lane.b32.xlu0 %v191, 104
    %v849 = vpop.permute.xlu0 %848
    %850 = vrot.lane.b32.xlu0 %v196, 104
    %v851 = vpop.permute.xlu0 %850
    %852 = vrot.lane.b32.xlu0 %v191, 72
    %v853 = vpop.permute.xlu0 %852
    %854 = vrot.lane.b32.xlu0 %v196, 72
    %v855 = vpop.permute.xlu0 %854
    %v856 = vsel %vm248, %v849, 0
    %v858 = vsel %vm248, %v851, 0
    %v860 = vsel %vm248, %v853, 0
    %v862 = vsel %vm248, %v855, 0
    %864 = vmatprep.subr.mxu0 0.0
    %865 = vmatpush1.xpose.msra.mxu0 0.0
    %866 = vmatprep.subr.mxu0 0.0
    %867 = vmatpush1.xpose.msra.mxu0 0.0
    %868 = vmatprep.subr.mxu0 0.0
    %869 = vmatpush1.xpose.msra.mxu0 0.0
    %870 = vmatprep.subr.mxu0 0.0
    %871 = vmatpush1.xpose.msra.mxu0 0.0
    %872 = vmatprep.subr.mxu0 0.0
    %873 = vmatpush1.xpose.msra.mxu0 0.0
    %874 = vmatprep.subr.mxu0 0.0
    %875 = vmatpush1.xpose.msra.mxu0 0.0
    %876 = vmatprep.subr.mxu0 0.0
    %877 = vmatpush1.xpose.msra.mxu0 0.0
    %878 = vmatprep.subr.mxu0 0.0
    %879 = vmatpush1.xpose.msra.mxu0 0.0
    %880 = vmatprep.subr.mxu0 0.0
    %881 = vmatpush1.xpose.msra.mxu0 0.0
    %882 = vmatprep.subr.mxu0 0.0
    %883 = vmatpush1.xpose.msra.mxu0 0.0
    %884 = vmatprep.subr.mxu0 0.0
    %885 = vmatpush1.xpose.msra.mxu0 0.0
    %886 = vmatprep.subr.mxu0 0.0
    %887 = vmatpush1.xpose.msra.mxu0 0.0
    %888 = vmatprep.subr.mxu0 0.0
    %889 = vmatpush1.xpose.msra.mxu0 0.0
    %890 = vmatprep.subr.mxu0 0.0
    %891 = vmatpush1.xpose.msra.mxu0 0.0
    %892 = vmatprep.subr.mxu0 0.0
    %893 = vmatpush1.xpose.msra.mxu0 %v862
    %894 = vmatprep.subr.mxu0 0.0
    %895 = vmatpush1.xpose.msra.mxu0 %v860
    %896 = vmatprep.subr.mxu0 0.0
    %897 = vmatpush2.xpose.msra.mxu0 0.0
    %898 = vmatprep.subr.mxu0 0.0
    %899 = vmatpush2.xpose.msra.mxu0 0.0
    %900 = vmatprep.subr.mxu0 0.0
    %901 = vmatpush2.xpose.msra.mxu0 0.0
    %902 = vmatprep.subr.mxu0 0.0
    %903 = vmatpush2.xpose.msra.mxu0 0.0
    %904 = vmatprep.subr.mxu0 0.0
    %905 = vmatpush2.xpose.msra.mxu0 0.0
    %906 = vmatprep.subr.mxu0 0.0
    %907 = vmatpush2.xpose.msra.mxu0 0.0
    %908 = vmatprep.subr.mxu0 0.0
    %909 = vmatpush2.xpose.msra.mxu0 0.0
    %910 = vmatprep.subr.mxu0 0.0
    %911 = vmatpush2.xpose.msra.mxu0 0.0
    %912 = vmatprep.subr.mxu0 0.0
    %913 = vmatpush2.xpose.msra.mxu0 0.0
    %914 = vmatprep.subr.mxu0 0.0
    %915 = vmatpush2.xpose.msra.mxu0 0.0
    %916 = vmatprep.subr.mxu0 0.0
    %917 = vmatpush2.xpose.msra.mxu0 0.0
    %918 = vmatprep.subr.mxu0 0.0
    %919 = vmatpush2.xpose.msra.mxu0 0.0
    %920 = vmatprep.subr.mxu0 0.0
    %921 = vmatpush2.xpose.msra.mxu0 0.0
    %922 = vmatprep.subr.mxu0 0.0
    %923 = vmatpush2.xpose.msra.mxu0 0.0
    %924 = vmatprep.subr.mxu0 0.0
    %925 = vmatpush2.xpose.msra.mxu0 0.0
    %926 = vmatprep.subr.mxu0 0.0
    %927 = vmatpush2.xpose.msra.mxu0 0.0
    %928 = vmatprep.mubr.f32.mxu0 0.0
    %929 = vmatmul.mubr.f32.gmra.mxu0 %v856
    %v930 = vpop.f32.mrf.mxu0
    %v931 = vadd.f32 0.0, %v930
    %v932 = vpop.f32.mrf.mxu0
    %933 = vmatprep.mubr.f32.mxu0 0.0
    %934 = vmatmul.mubr.f32.gmra.mxu0 %v858
    %v935 = vpop.f32.mrf.mxu0
    %v936 = vadd.f32 0.0, %v935
    %v937 = vpop.f32.mrf.mxu0
    %938 = vdwg.mxu0
    %v939 = vsel %vm240, %v931, -1e+30
    %v940 = vsel %vm241, %v936, -1e+30
    %v941 = vsel %vm334, %v939, -inf
    %942 = vmax.xlane.f32.xlu0 %v941
    %v943 = vpop.xlane.xlu0 %942
    %v944 = vsel %vm334, %v940, -inf
    %945 = vmax.xlane.f32.xlu0 %v944
    %v946 = vpop.xlane.xlu0 %945
    %v947 = vsub.f32 %v939, %v943
    %v948 = vsub.f32 %v940, %v946
    %v949 = vmul.f32 %v947, 1.442695
    %v950 = vpow.pop %v949
    %v951 = vmul.f32 %v948, 1.442695
    %v952 = vpow.pop %v951
    %v953 = vsel %vm334, %v950, 0.0
    %954 = vadd.xlane.f32.xlu0 %v953
    %v955 = vpop.xlane.xlu0 %954
    %v956 = vsel %vm334, %v952, 0.0
    %957 = vadd.xlane.f32.xlu0 %v956
    %v958 = vpop.xlane.xlu0 %957
    %v959 = vrcp.pop %v955
    %v960 = vrcp.pop %v958
    %v961 = vmul.f32 %v950, %v959
    %v962 = vmul.f32 %v952, %v960
    %963 = vrot.lane.b32.xlu0 %v191, 40
    %v964 = vpop.permute.xlu0 %963
    %965 = vrot.lane.b32.xlu0 %v196, 40
    %v966 = vpop.permute.xlu0 %965
    %v970 = vsel %vm334, %v961, 0
    %v973 = vsel %vm334, %v962, 0
    %975 = vmatprep.subr.mxu0 0.0
    %976 = vmatpush1.msra.mxu0 0.0
    %977 = vmatprep.subr.mxu0 0.0
    %978 = vmatpush1.msra.mxu0 0.0
    %979 = vmatprep.subr.mxu0 0.0
    %980 = vmatpush1.msra.mxu0 0.0
    %981 = vmatprep.subr.mxu0 0.0
    %982 = vmatpush1.msra.mxu0 0.0
    %983 = vmatprep.subr.mxu0 0.0
    %984 = vmatpush1.msra.mxu0 0.0
    %985 = vmatprep.subr.mxu0 0.0
    %986 = vmatpush1.msra.mxu0 0.0
    %987 = vmatprep.subr.mxu0 0.0
    %988 = vmatpush1.msra.mxu0 0.0
    %989 = vmatprep.subr.mxu0 0.0
    %990 = vmatpush1.msra.mxu0 0.0
    %991 = vmatprep.subr.mxu0 0.0
    %992 = vmatpush1.msra.mxu0 0.0
    %993 = vmatprep.subr.mxu0 0.0
    %994 = vmatpush1.msra.mxu0 0.0
    %995 = vmatprep.subr.mxu0 0.0
    %996 = vmatpush1.msra.mxu0 0.0
    %997 = vmatprep.subr.mxu0 0.0
    %998 = vmatpush1.msra.mxu0 0.0
    %999 = vmatprep.subr.mxu0 0.0
    %1000 = vmatpush1.msra.mxu0 0.0
    %1001 = vmatprep.subr.mxu0 0.0
    %1002 = vmatpush1.msra.mxu0 0.0
    %1003 = vmatprep.subr.mxu0 0.0
    %1004 = vmatpush1.msra.mxu0 %v966
    %1005 = vmatprep.subr.mxu0 0.0
    %1006 = vmatpush1.msra.mxu0 %v964
    %1007 = vmatprep.subr.mxu0 0.0
    %1008 = vmatpush2.msra.mxu0 0.0
    %1009 = vmatprep.subr.mxu0 0.0
    %1010 = vmatpush2.msra.mxu0 0.0
    %1011 = vmatprep.subr.mxu0 0.0
    %1012 = vmatpush2.msra.mxu0 0.0
    %1013 = vmatprep.subr.mxu0 0.0
    %1014 = vmatpush2.msra.mxu0 0.0
    %1015 = vmatprep.subr.mxu0 0.0
    %1016 = vmatpush2.msra.mxu0 0.0
    %1017 = vmatprep.subr.mxu0 0.0
    %1018 = vmatpush2.msra.mxu0 0.0
    %1019 = vmatprep.subr.mxu0 0.0
    %1020 = vmatpush2.msra.mxu0 0.0
    %1021 = vmatprep.subr.mxu0 0.0
    %1022 = vmatpush2.msra.mxu0 0.0
    %1023 = vmatprep.subr.mxu0 0.0
    %1024 = vmatpush2.msra.mxu0 0.0
    %1025 = vmatprep.subr.mxu0 0.0
    %1026 = vmatpush2.msra.mxu0 0.0
    %1027 = vmatprep.subr.mxu0 0.0
    %1028 = vmatpush2.msra.mxu0 0.0
    %1029 = vmatprep.subr.mxu0 0.0
    %1030 = vmatpush2.msra.mxu0 0.0
    %1031 = vmatprep.subr.mxu0 0.0
    %1032 = vmatpush2.msra.mxu0 0.0
    %1033 = vmatprep.subr.mxu0 0.0
    %1034 = vmatpush2.msra.mxu0 0.0
    %1035 = vmatprep.subr.mxu0 0.0
    %1036 = vmatpush2.msra.mxu0 0.0
    %1037 = vmatprep.subr.mxu0 0.0
    %1038 = vmatpush2.msra.mxu0 0.0
    %1039 = vmatprep.mubr.f32.mxu0 0.0
    %1040 = vmatmul.mubr.f32.gmra.mxu0 %v970
    %v1041 = vpop.f32.mrf.mxu0
    %v1042 = vadd.f32 0.0, %v1041
    %v1043 = vpop.f32.mrf.mxu0
    %1044 = vmatprep.mubr.f32.mxu0 0.0
    %1045 = vmatmul.mubr.f32.gmra.mxu0 %v973
    %v1046 = vpop.f32.mrf.mxu0
    %v1047 = vadd.f32 0.0, %v1046
    %v1048 = vpop.f32.mrf.mxu0
    %1049 = vdwg.mxu0
    %1052 = vrot.lane.b32.xlu0 %v638, 8
    %v1053 = vpop.permute.xlu0 %1052
    %1054 = vrot.lane.b32.xlu0 %v643, 8
    %v1055 = vpop.permute.xlu0 %1054
    %1060 = vrot.lane.b32.xlu0 %v840, 16
    %v1061 = vpop.permute.xlu0 %1060
    %1062 = vrot.lane.b32.xlu0 %v845, 16
    %v1063 = vpop.permute.xlu0 %1062
    %1068 = vrot.lane.b32.xlu0 %v1042, 24
    %v1069 = vpop.permute.xlu0 %1068
    %1070 = vrot.lane.b32.xlu0 %v1047, 24
    %v1071 = vpop.permute.xlu0 %1070
    %v1074 = vsel %vm248, %v436, %v1053
    %v1075 = vsel %vm248, %v441, %v1055
    %v1076 = vsel %vm334, %v1074, %v1061
    %v1077 = vsel %vm334, %v1075, %v1063
    %vm1078 = vcmask 195584
    %v1079 = vsel %vm1078, %v1076, %v1069
    %v1080 = vsel %vm1078, %v1077, %v1071
    %v1081 = vld [vmem:[%s5] sm:$0xff]
    %v1082 = vld [vmem:[%s5 + $0x8] sm:$0xff]
    %v1083 = vld [vmem:[%s5 + $0x10] sm:$0xff]
    %v1084 = vld [vmem:[%s5 + $0x18] sm:$0xff]
    %v1085 = vld [vmem:[%s6] sm:$0x1]
    %v1087 = vlaneseq
    %v1088 = vshrl.u32 %v1087, 7
    %v1089 = vsub.s32 0, %v1088
    %v1090 = vrot.slane %v1085, %v1089
    %v1093 = vsel %vm63, %v1079, 0
    %v1096 = vsel %vm63, %v1080, 0
    %1098 = vmatprep.subr.mxu0 0.0
    %1099 = vmatpush1.msra.mxu0 0.0
    %1100 = vmatprep.subr.mxu0 0.0
    %1101 = vmatpush1.msra.mxu0 0.0
    %1102 = vmatprep.subr.mxu0 0.0
    %1103 = vmatpush1.msra.mxu0 0.0
    %1104 = vmatprep.subr.mxu0 0.0
    %1105 = vmatpush1.msra.mxu0 0.0
    %1106 = vmatprep.subr.mxu0 0.0
    %1107 = vmatpush1.msra.mxu0 0.0
    %1108 = vmatprep.subr.mxu0 0.0
    %1109 = vmatpush1.msra.mxu0 0.0
    %1110 = vmatprep.subr.mxu0 0.0
    %1111 = vmatpush1.msra.mxu0 0.0
    %1112 = vmatprep.subr.mxu0 0.0
    %1113 = vmatpush1.msra.mxu0 0.0
    %1114 = vmatprep.subr.mxu0 0.0
    %1115 = vmatpush1.msra.mxu0 0.0
    %1116 = vmatprep.subr.mxu0 0.0
    %1117 = vmatpush1.msra.mxu0 0.0
    %1118 = vmatprep.subr.mxu0 0.0
    %1119 = vmatpush1.msra.mxu0 0.0
    %1120 = vmatprep.subr.mxu0 0.0
    %1121 = vmatpush1.msra.mxu0 0.0
    %1122 = vmatprep.subr.mxu0 0.0
    %1123 = vmatpush1.msra.mxu0 %v1084
    %1124 = vmatprep.subr.mxu0 0.0
    %1125 = vmatpush1.msra.mxu0 %v1083
    %1126 = vmatprep.subr.mxu0 0.0
    %1127 = vmatpush1.msra.mxu0 %v1082
    %1128 = vmatprep.subr.mxu0 0.0
    %1129 = vmatpush1.msra.mxu0 %v1081
    %1130 = vmatprep.subr.mxu0 0.0
    %1131 = vmatpush2.msra.mxu0 0.0
    %1132 = vmatprep.subr.mxu0 0.0
    %1133 = vmatpush2.msra.mxu0 0.0
    %1134 = vmatprep.subr.mxu0 0.0
    %1135 = vmatpush2.msra.mxu0 0.0
    %1136 = vmatprep.subr.mxu0 0.0
    %1137 = vmatpush2.msra.mxu0 0.0
    %1138 = vmatprep.subr.mxu0 0.0
    %1139 = vmatpush2.msra.mxu0 0.0
    %1140 = vmatprep.subr.mxu0 0.0
    %1141 = vmatpush2.msra.mxu0 0.0
    %1142 = vmatprep.subr.mxu0 0.0
    %1143 = vmatpush2.msra.mxu0 0.0
    %1144 = vmatprep.subr.mxu0 0.0
    %1145 = vmatpush2.msra.mxu0 0.0
    %1146 = vmatprep.subr.mxu0 0.0
    %1147 = vmatpush2.msra.mxu0 0.0
    %1148 = vmatprep.subr.mxu0 0.0
    %1149 = vmatpush2.msra.mxu0 0.0
    %1150 = vmatprep.subr.mxu0 0.0
    %1151 = vmatpush2.msra.mxu0 0.0
    %1152 = vmatprep.subr.mxu0 0.0
    %1153 = vmatpush2.msra.mxu0 0.0
    %1154 = vmatprep.subr.mxu0 0.0
    %1155 = vmatpush2.msra.mxu0 0.0
    %1156 = vmatprep.subr.mxu0 0.0
    %1157 = vmatpush2.msra.mxu0 0.0
    %1158 = vmatprep.subr.mxu0 0.0
    %1159 = vmatpush2.msra.mxu0 0.0
    %1160 = vmatprep.subr.mxu0 0.0
    %1161 = vmatpush2.msra.mxu0 0.0
    %1162 = vmatprep.mubr.f32.mxu0 0.0
    %1163 = vmatmul.mubr.f32.gmra.mxu0 %v1093
    %v1164 = vpop.f32.mrf.mxu0
    %v1165 = vadd.f32 %v1090, %v1164
    %v1166 = vpop.f32.mrf.mxu0
    %1167 = vmatprep.mubr.f32.mxu0 0.0
    %1168 = vmatmul.mubr.f32.gmra.mxu0 %v1096
    %v1169 = vpop.f32.mrf.mxu0
    %v1170 = vadd.f32 %v1090, %v1169
    %v1171 = vpop.f32.mrf.mxu0
    %1172 = vdwg.mxu0
    %v1173 = vadd.f32 %v59, %v1165
    %v1174 = vadd.f32 %v60, %v1170
    %v1175 = vld [vmem:[%s7] sm:$0x1]
    %v1176 = vld [vmem:[%s8] sm:$0x1]
    %v1177 = vsel %vm63, %v1173, 0.0
    %1178 = vadd.xlane.f32.xlu0 %v1177
    %v1179 = vpop.xlane.xlu0 %1178
    %v1180 = vsel %vm63, %v1174, 0.0
    %1181 = vadd.xlane.f32.xlu0 %v1180
    %v1182 = vpop.xlane.xlu0 %1181
    %v1183 = vmul.f32 %v1179, %v70
    %v1184 = vmul.f32 %v1182, %v70
    %v1185 = vsub.f32 %v1173, %v1183
    %v1186 = vsub.f32 %v1174, %v1184
    %v1187 = vmul.f32 %v1185, %v1185
    %v1188 = vmul.f32 %v1186, %v1186
    %v1189 = vsel %vm63, %v1187, 0.0
    %1190 = vadd.xlane.f32.xlu0 %v1189
    %v1191 = vpop.xlane.xlu0 %1190
    %v1192 = vsel %vm63, %v1188, 0.0
    %1193 = vadd.xlane.f32.xlu0 %v1192
    %v1194 = vpop.xlane.xlu0 %1193
    %v1195 = vmul.f32 %v1191, %v70
    %v1196 = vmul.f32 %v1194, %v70
    %v1197 = vadd.f32 %v1195, 1e-05
    %v1198 = vadd.f32 %v1196, 1e-05
    %v1199 = vrsqrt.pop %v1197
    %v1200 = vrsqrt.pop %v1198
    %v1201 = vmul.f32 %v1185, %v1199
    %v1202 = vmul.f32 %v1186, %v1200
    %v1204 = vlaneseq
    %v1205 = vshrl.u32 %v1204, 7
    %v1206 = vsub.s32 0, %v1205
    %v1207 = vrot.slane %v1175, %v1206
    %v1209 = vmul.f32 %v1201, %v1207
    %v1210 = vmul.f32 %v1202, %v1207
    %v1212 = vlaneseq
    %v1213 = vshrl.u32 %v1212, 7
    %v1214 = vsub.s32 0, %v1213
    %v1215 = vrot.slane %v1176, %v1214
    %v1217 = vadd.f32 %v1209, %v1215
    %v1218 = vadd.f32 %v1210, %v1215
    %v1219 = vld [vmem:[%s9] sm:$0xff]
    %v1220 = vld [vmem:[%s9 + $0x8] sm:$0xff]
    %v1221 = vld [vmem:[%s9 + $0x10] sm:$0xff]
    %v1222 = vld [vmem:[%s9 + $0x18] sm:$0xff]
    %v1223 = vld [vmem:[%s10] sm:$0x1]
    %v1225 = vlaneseq
    %v1226 = vshrl.u32 %v1225, 7
    %v1227 = vsub.s32 0, %v1226
    %v1228 = vrot.slane %v1223, %v1227
    %v1231 = vsel %vm63, %v1217, 0
    %v1234 = vsel %vm63, %v1218, 0
    %1236 = vmatprep.subr.mxu0 0.0
    %1237 = vmatpush1.msra.mxu0 0.0
    %1238 = vmatprep.subr.mxu0 0.0
    %1239 = vmatpush1.msra.mxu0 0.0
    %1240 = vmatprep.subr.mxu0 0.0
    %1241 = vmatpush1.msra.mxu0 0.0
    %1242 = vmatprep.subr.mxu0 0.0
    %1243 = vmatpush1.msra.mxu0 0.0
    %1244 = vmatprep.subr.mxu0 0.0
    %1245 = vmatpush1.msra.mxu0 0.0
    %1246 = vmatprep.subr.mxu0 0.0
    %1247 = vmatpush1.msra.mxu0 0.0
    %1248 = vmatprep.subr.mxu0 0.0
    %1249 = vmatpush1.msra.mxu0 0.0
    %1250 = vmatprep.subr.mxu0 0.0
    %1251 = vmatpush1.msra.mxu0 0.0
    %1252 = vmatprep.subr.mxu0 0.0
    %1253 = vmatpush1.msra.mxu0 0.0
    %1254 = vmatprep.subr.mxu0 0.0
    %1255 = vmatpush1.msra.mxu0 0.0
    %1256 = vmatprep.subr.mxu0 0.0
    %1257 = vmatpush1.msra.mxu0 0.0
    %1258 = vmatprep.subr.mxu0 0.0
    %1259 = vmatpush1.msra.mxu0 0.0
    %1260 = vmatprep.subr.mxu0 0.0
    %1261 = vmatpush1.msra.mxu0 %v1222
    %1262 = vmatprep.subr.mxu0 0.0
    %1263 = vmatpush1.msra.mxu0 %v1221
    %1264 = vmatprep.subr.mxu0 0.0
    %1265 = vmatpush1.msra.mxu0 %v1220
    %1266 = vmatprep.subr.mxu0 0.0
    %1267 = vmatpush1.msra.mxu0 %v1219
    %1268 = vmatprep.subr.mxu0 0.0
    %1269 = vmatpush2.msra.mxu0 0.0
    %1270 = vmatprep.subr.mxu0 0.0
    %1271 = vmatpush2.msra.mxu0 0.0
    %1272 = vmatprep.subr.mxu0 0.0
    %1273 = vmatpush2.msra.mxu0 0.0
    %1274 = vmatprep.subr.mxu0 0.0
    %1275 = vmatpush2.msra.mxu0 0.0
    %1276 = vmatprep.subr.mxu0 0.0
    %1277 = vmatpush2.msra.mxu0 0.0
    %1278 = vmatprep.subr.mxu0 0.0
    %1279 = vmatpush2.msra.mxu0 0.0
    %1280 = vmatprep.subr.mxu0 0.0
    %1281 = vmatpush2.msra.mxu0 0.0
    %1282 = vmatprep.subr.mxu0 0.0
    %1283 = vmatpush2.msra.mxu0 0.0
    %1284 = vmatprep.subr.mxu0 0.0
    %1285 = vmatpush2.msra.mxu0 0.0
    %1286 = vmatprep.subr.mxu0 0.0
    %1287 = vmatpush2.msra.mxu0 0.0
    %1288 = vmatprep.subr.mxu0 0.0
    %1289 = vmatpush2.msra.mxu0 0.0
    %1290 = vmatprep.subr.mxu0 0.0
    %1291 = vmatpush2.msra.mxu0 0.0
    %1292 = vmatprep.subr.mxu0 0.0
    %1293 = vmatpush2.msra.mxu0 0.0
    %1294 = vmatprep.subr.mxu0 0.0
    %1295 = vmatpush2.msra.mxu0 0.0
    %1296 = vmatprep.subr.mxu0 0.0
    %1297 = vmatpush2.msra.mxu0 0.0
    %1298 = vmatprep.subr.mxu0 0.0
    %1299 = vmatpush2.msra.mxu0 0.0
    %1300 = vmatprep.mubr.f32.mxu0 0.0
    %1301 = vmatmul.mubr.f32.gmra.mxu0 %v1231
    %v1302 = vpop.f32.mrf.mxu0
    %v1303 = vadd.f32 %v1228, %v1302
    %v1304 = vpop.f32.mrf.mxu0
    %1305 = vmatprep.mubr.f32.mxu0 0.0
    %1306 = vmatmul.mubr.f32.gmra.mxu0 %v1234
    %v1307 = vpop.f32.mrf.mxu0
    %v1308 = vadd.f32 %v1228, %v1307
    %v1309 = vpop.f32.mrf.mxu0
    %1310 = vdwg.mxu0
    %v1311 = vmul.f32 %v1303, 0.5
    %v1312 = vmul.f32 %v1308, 0.5
    %v1313 = vmul.f32 %v1303, 0.70710677
    %v1314 = vmul.f32 %v1308, 0.70710677
    %v1315 = verf.f32.pop %v1313
    %v1316 = verf.f32.pop %v1314
    %v1317 = vadd.f32 %v1315, 1.0
    %v1318 = vadd.f32 %v1316, 1.0
    %v1319 = vmul.f32 %v1311, %v1317
    %v1320 = vmul.f32 %v1312, %v1318
    %v1321 = vld [vmem:[%s11] sm:$0xff]
    %v1322 = vld [vmem:[%s11 + $0x8] sm:$0xff]
    %v1323 = vld [vmem:[%s11 + $0x10] sm:$0xff]
    %v1324 = vld [vmem:[%s11 + $0x18] sm:$0xff]
    %v1325 = vld [vmem:[%s11 + $0x20] sm:$0xff]
    %v1326 = vld [vmem:[%s11 + $0x28] sm:$0xff]
    %v1327 = vld [vmem:[%s11 + $0x30] sm:$0xff]
    %v1328 = vld [vmem:[%s11 + $0x38] sm:$0xff]
    %v1329 = vld [vmem:[%s12] sm:$0x1]
    %v1331 = vlaneseq
    %v1332 = vshrl.u32 %v1331, 7
    %v1333 = vsub.s32 0, %v1332
    %v1334 = vrot.slane %v1329, %v1333
    %vm1336 = vcmask 523264
    %v1338 = vsel %vm1336, %v1319, 0
    %v1341 = vsel %vm1336, %v1320, 0
    %1343 = vmatprep.subr.mxu0 0.0
    %1344 = vmatpush1.msra.mxu0 0.0
    %1345 = vmatprep.subr.mxu0 0.0
    %1346 = vmatpush1.msra.mxu0 0.0
    %1347 = vmatprep.subr.mxu0 0.0
    %1348 = vmatpush1.msra.mxu0 0.0
    %1349 = vmatprep.subr.mxu0 0.0
    %1350 = vmatpush1.msra.mxu0 0.0
    %1351 = vmatprep.subr.mxu0 0.0
    %1352 = vmatpush1.msra.mxu0 0.0
    %1353 = vmatprep.subr.mxu0 0.0
    %1354 = vmatpush1.msra.mxu0 0.0
    %1355 = vmatprep.subr.mxu0 0.0
    %1356 = vmatpush1.msra.mxu0 0.0
    %1357 = vmatprep.subr.mxu0 0.0
    %1358 = vmatpush1.msra.mxu0 0.0
    %1359 = vmatprep.subr.mxu0 0.0
    %1360 = vmatpush1.msra.mxu0 %v1328
    %1361 = vmatprep.subr.mxu0 0.0
    %1362 = vmatpush1.msra.mxu0 %v1327
    %1363 = vmatprep.subr.mxu0 0.0
    %1364 = vmatpush1.msra.mxu0 %v1326
    %1365 = vmatprep.subr.mxu0 0.0
    %1366 = vmatpush1.msra.mxu0 %v1325
    %1367 = vmatprep.subr.mxu0 0.0
    %1368 = vmatpush1.msra.mxu0 %v1324
    %1369 = vmatprep.subr.mxu0 0.0
    %1370 = vmatpush1.msra.mxu0 %v1323
    %1371 = vmatprep.subr.mxu0 0.0
    %1372 = vmatpush1.msra.mxu0 %v1322
    %1373 = vmatprep.subr.mxu0 0.0
    %1374 = vmatpush1.msra.mxu0 %v1321
    %1375 = vmatprep.subr.mxu0 0.0
    %1376 = vmatpush2.msra.mxu0 0.0
    %1377 = vmatprep.subr.mxu0 0.0
    %1378 = vmatpush2.msra.mxu0 0.0
    %1379 = vmatprep.subr.mxu0 0.0
    %1380 = vmatpush2.msra.mxu0 0.0
    %1381 = vmatprep.subr.mxu0 0.0
    %1382 = vmatpush2.msra.mxu0 0.0
    %1383 = vmatprep.subr.mxu0 0.0
    %1384 = vmatpush2.msra.mxu0 0.0
    %1385 = vmatprep.subr.mxu0 0.0
    %1386 = vmatpush2.msra.mxu0 0.0
    %1387 = vmatprep.subr.mxu0 0.0
    %1388 = vmatpush2.msra.mxu0 0.0
    %1389 = vmatprep.subr.mxu0 0.0
    %1390 = vmatpush2.msra.mxu0 0.0
    %1391 = vmatprep.subr.mxu0 0.0
    %1392 = vmatpush2.msra.mxu0 0.0
    %1393 = vmatprep.subr.mxu0 0.0
    %1394 = vmatpush2.msra.mxu0 0.0
    %1395 = vmatprep.subr.mxu0 0.0
    %1396 = vmatpush2.msra.mxu0 0.0
    %1397 = vmatprep.subr.mxu0 0.0
    %1398 = vmatpush2.msra.mxu0 0.0
    %1399 = vmatprep.subr.mxu0 0.0
    %1400 = vmatpush2.msra.mxu0 0.0
    %1401 = vmatprep.subr.mxu0 0.0
    %1402 = vmatpush2.msra.mxu0 0.0
    %1403 = vmatprep.subr.mxu0 0.0
    %1404 = vmatpush2.msra.mxu0 0.0
    %1405 = vmatprep.subr.mxu0 0.0
    %1406 = vmatpush2.msra.mxu0 0.0
    %1407 = vmatprep.mubr.f32.mxu0 0.0
    %1408 = vmatmul.mubr.f32.gmra.mxu0 %v1338
    %v1409 = vpop.f32.mrf.mxu0
    %v1410 = vadd.f32 %v1334, %v1409
    %v1411 = vpop.f32.mrf.mxu0
    %1412 = vmatprep.mubr.f32.mxu0 0.0
    %1413 = vmatmul.mubr.f32.gmra.mxu0 %v1341
    %v1414 = vpop.f32.mrf.mxu0
    %v1415 = vadd.f32 %v1334, %v1414
    %v1416 = vpop.f32.mrf.mxu0
    %1417 = vdwg.mxu0
    %v1418 = vadd.f32 %v1173, %v1410
    %v1419 = vadd.f32 %v1174, %v1415
    %1420 = vst.msk [vmem:[#allocation5] sm:$0xff] %vm63, %v1418
    %1421 = vst.msk [vmem:[#allocation5 + $0x8] sm:$0xff] %vm63, %v1419
    // Predicated region
    $region58: #{tpu_custom_call.1} parent=1 // pred_check
      _
    $region59: #{tpu_custom_call.1} parent=1 // pred_check_branch
      %1423 = sbr.rel (0) target = $region61
    $region60: #{tpu_custom_call.1} parent=1 // pred_region
      %s1425 = ssub.s32 256, 256
      %1426 = vsyncadd [#allocation4], %s1425
      %s1427 = sshll.u32 [#allocation5], 4
      %s1428 = int_to_ptr.vmem [resolvable:$true] %s1427
      %1433 = dma.vmem_to_hbm [thread:$0]  %s1428, 256, %s13, [#allocation4], 128, 128, 8
    $region61: #{tpu_custom_call.1} parent=1 // pred_fallthru
      _
    // Predicated region
    $region62: #{tpu_custom_call.1} parent=1 // pred_check
      _
    $region63: #{tpu_custom_call.1} parent=1 // pred_check_branch
      %1435 = sbr.rel (0) target = $region65
    $region64: #{tpu_custom_call.1} parent=1 // pred_region
      %1436 = dma.done [#allocation4], 256
    $region65: #{tpu_custom_call.1} parent=1 // pred_fallthru
      _
    %1437 = vsyncpa [#allocation3], 1
    %1438 = vsyncpa [#allocation4], 1

</llo_original>
